<compile_context>
chip_gen: v6e
topology: v6e:2x2x1
jax: 0.10.0
libtpu: 0.0.40
codegen_flags: <defaults>
</compile_context>

<pallas_src>
import math
import functools

import numpy as np
import jax
import jax.numpy as jnp
from jax.experimental import pallas as pl
from jax.experimental.pallas import tpu as pltpu


# ----------------------------------------------------------------------------
# Kernel A: RMSNorm1 + QKV (per KV group) + RoPE + flash causal attention.
# ----------------------------------------------------------------------------
def _attn_kernel(x_ref, ln1_ref, wq_ref, bq_ref, wk_ref, bk_ref, wv_ref, bv_ref,
                 cos_ref, sin_ref, ctx_ref, k_scr, v_scr,
                 *, rep, head_dim, eps, kv_tile):
    f32, bf16 = jnp.float32, jnp.bfloat16
    S = x_ref.shape[1]
    rh = head_dim // 4
    n_kv = S // kv_tile

    # ---- input RMSNorm (f32) ----
    x = x_ref[0].astype(f32)                                       # [S, H]
    var = jnp.mean(x * x, axis=-1, keepdims=True)
    ln1 = (x * jax.lax.rsqrt(var + eps) * ln1_ref[...]).astype(bf16)

    cos = cos_ref[...]                                             # [S, head_dim//4]
    sin = sin_ref[...]

    def rope(t):
        # t: [S, head_dim] in the host-permuted [even | odd | pass] layout, so the
        # interleaved rotation is plain VPU math (no pair-swap permutation matmul).
        e = t[:, :rh]
        o = t[:, rh:2 * rh]
        p = t[:, 2 * rh:]
        return jnp.concatenate([e * cos - o * sin, o * cos + e * sin, p], axis=-1)

    # ---- K/V for this KV group (weight blocks streamed by the group grid axis) --
    k = jnp.dot(ln1, wk_ref[...], preferred_element_type=f32) + bk_ref[...]
    v = jnp.dot(ln1, wv_ref[...], preferred_element_type=f32) + bv_ref[...]
    k_scr[...] = rope(k).astype(bf16)                              # [S, head_dim]
    v_scr[...] = v.astype(bf16)

    # ---- Q for the rep heads of this group (softmax scale folded into wq/bq) ----
    q = jnp.dot(ln1, wq_ref[...], preferred_element_type=f32) + bq_ref[...]

    row = jax.lax.broadcasted_iota(jnp.int32, (S, kv_tile), 0)
    col = jax.lax.broadcasted_iota(jnp.int32, (S, kv_tile), 1)

    for h in range(rep):   # only this group's heads (rep == 2 for ChatGLM2-6B)
        qh = rope(q[:, h * head_dim:(h + 1) * head_dim]).astype(bf16)

        def kv_step(t, carry, qh=qh):
            m, l, acc = carry
            off = pl.multiple_of(t * kv_tile, kv_tile)
            kt = k_scr[pl.ds(off, kv_tile), :]                     # [kv_tile, hd]
            vt = v_scr[pl.ds(off, kv_tile), :]
            s = jax.lax.dot_general(qh, kt, (((1,), (1,)), ((), ())),
                                    preferred_element_type=f32)    # [S, kv_tile]
            s = jnp.where((t * kv_tile + col) <= row, s, -1e30)
            m_new = jnp.maximum(m, jnp.max(s, axis=-1, keepdims=True))
            alpha = jnp.exp(m - m_new)
            p = jnp.exp(s - m_new)
            l_new = alpha * l + jnp.sum(p, axis=-1, keepdims=True)
            acc_new = alpha * acc + jnp.dot(p.astype(bf16), vt,
                                            preferred_element_type=f32)
            return m_new, l_new, acc_new

        m0 = jnp.full((S, 1), -1e30, f32)
        l0 = jnp.zeros((S, 1), f32)
        a0 = jnp.zeros((S, head_dim), f32)
        m, l, acc = jax.lax.fori_loop(0, n_kv, kv_step, (m0, l0, a0))

        ctx = acc * pl.reciprocal(l, approx=True)
        ctx_ref[0, :, h * head_dim:(h + 1) * head_dim] = ctx.astype(ctx_ref.dtype)


# ----------------------------------------------------------------------------
# Kernel B: dense proj (full K) + residual + RMSNorm2 + streamed SwiGLU MLP.
# ----------------------------------------------------------------------------
def _mlp_kernel(ctx_ref, x_ref, wd_ref, ln2_ref, wg_ref, wu_ref, wdn_ref,
                out_ref, h1_scr, ln2_scr, acc_scr, *, eps):
    f32, bf16 = jnp.float32, jnp.bfloat16
    f = pl.program_id(2)

    @pl.when(f == 0)
    def _():
        # Output projection over the full K = num_heads*head_dim in one MXU pass,
        # residual (hidden_dropout = 0.0) and post-attention RMSNorm; cached in
        # VMEM scratch for the FFN-tile sweep.
        h1 = x_ref[0].astype(f32) + jnp.dot(ctx_ref[0], wd_ref[...],
                                            preferred_element_type=f32)
        h1_scr[...] = h1
        var = jnp.mean(h1 * h1, axis=-1, keepdims=True)
        ln2_scr[...] = (h1 * jax.lax.rsqrt(var + eps) * ln2_ref[...]).astype(bf16)
        acc_scr[...] = jnp.zeros_like(acc_scr)

    # ---- one streamed SwiGLU FFN tile: gate/up column tile, down row tile ------
    ln2 = ln2_scr[...]
    a = jnp.dot(ln2, wg_ref[...], preferred_element_type=f32)
    b = jnp.dot(ln2, wu_ref[...], preferred_element_type=f32)
    swi = (a * jax.nn.sigmoid(a) * b).astype(bf16)
    acc_scr[...] += jnp.dot(swi, wdn_ref[...], preferred_element_type=f32)

    @pl.when(f == pl.num_programs(2) - 1)
    def _():
        out_ref[0] = (h1_scr[...] + acc_scr[...]).astype(out_ref.dtype)


# ----------------------------------------------------------------------------
# Host-side helpers.
# ----------------------------------------------------------------------------
def rotary_cache(seq_len, head_dim):
    # ChatGLM RotaryEmbedding(dim=head_dim//2) -> cos/sin of shape [S, head_dim//4]
    n_elem = head_dim // 2
    theta = 1.0 / (10000.0 ** (np.arange(0, n_elem, 2, dtype=np.float64) / n_elem))
    ang = np.outer(np.arange(seq_len, dtype=np.float64), theta)
    return np.cos(ang).astype(np.float32), np.sin(ang).astype(np.float32)


def _split_rope_perm(head_dim, n_heads):
    # Per head: interleaved rotary dims -> [even..., odd..., pass-through...].
    # Applied to q/k weight columns (and biases) host-side; attention scores are
    # invariant because q and k share the per-head permutation.
    rot_dim = head_dim // 2
    base = np.concatenate([np.arange(0, rot_dim, 2),
                           np.arange(1, rot_dim, 2),
                           np.arange(rot_dim, head_dim)])
    return np.concatenate([h * head_dim + base for h in range(n_heads)])


def _vmem_limit_bytes(default=64 * 1024 * 1024):
    # ~3/4 of physical per-core VMEM: ~96 MiB on v5e/v6e, ~48 MiB on v7x.
    try:
        cap = getattr(pltpu.get_tpu_info(), "vmem_capacity_bytes", None)
        if cap:
            return (int(cap) * 3) // 4
    except Exception:
        pass
    return default


def _single_buffer_kwargs():
    # Grid-invariant operands do not need double-buffering; halving their VMEM.
    try:
        kwargs = {"pipeline_mode": pl.Buffered(buffer_count=1)}
        pl.BlockSpec((8, 128), lambda i: (0, 0), **kwargs)   # probe the API
        return kwargs
    except Exception:
        return {}


# ----------------------------------------------------------------------------
# Wrapper == GLMBlockPipeLayer.forward: ipt = (hidden_states [S,B,H], labels)
# ----------------------------------------------------------------------------
def glm_block_pipe_layer(ipt, params, *, num_heads, kv_groups, head_dim,
                         eps=1e-5, kv_tile=None, ffn_tile=None, row_tile=None,
                         out_dtype=None):
    hidden_sbh, labels = ipt
    S, B, H = hidden_sbh.shape
    assert num_heads % kv_groups == 0 and head_dim % 4 == 0
    # Blocking constraints of this kernel (hold for ChatGLM2: head_dim=128).
    assert head_dim % 128 == 0 and H % 128 == 0 and S % 8 == 0

    rep = num_heads // kv_groups
    nph = num_heads * head_dim
    rh = head_dim // 4
    ffn = params["w_h_to_4h"].shape[-1] // 2

    if kv_tile is None:
        kv_tile = min(S, 512)
    if row_tile is None:
        row_tile = min(S, 256)
    if ffn_tile is None:
        ffn_tile = min(ffn, 512)   # use >=256-wide N tiles for the v6e/v7x MXU
    assert S % kv_tile == 0 and S % row_tile == 0 and row_tile % 8 == 0
    assert ffn % ffn_tile == 0 and ffn_tile % 128 == 0
    if out_dtype is None:
        out_dtype = hidden_sbh.dtype          # pass bf16 here to halve writeback

    vmem_limit = _vmem_limit_bytes()
    single = _single_buffer_kwargs()
    bf16 = jnp.bfloat16

    cos_np, sin_np = rotary_cache(S, head_dim)   # == g_pos_encoder(seq_len=S)

    # Host-side prep (free): RoPE column permutation of q/k, 1/sqrt(head_dim)
    # folded into wq/bq, gate/up split, bf16 weight casts.
    perm_q = _split_rope_perm(head_dim, num_heads)
    perm_k = _split_rope_perm(head_dim, kv_groups)
    scale = 1.0 / math.sqrt(head_dim)
    wq = (params["wq"][:, perm_q] * scale).astype(bf16)
    bq = (params["bq"][perm_q] * scale).reshape(1, nph).astype(jnp.float32)
    wk = params["wk"][:, perm_k].astype(bf16)
    bk = params["bk"][perm_k].reshape(1, -1).astype(jnp.float32)
    wv = params["wv"].astype(bf16)
    bv = params["bv"].reshape(1, -1).astype(jnp.float32)
    wd = params["w_dense"].astype(bf16)
    w_gate = params["w_h_to_4h"][:, :ffn].astype(bf16)
    w_up = params["w_h_to_4h"][:, ffn:].astype(bf16)
    w_down = params["w_4h_to_h"].astype(bf16)
    ln1_w = params["ln1_w"].reshape(1, H).astype(jnp.float32)
    ln2_w = params["ln2_w"].reshape(1, H).astype(jnp.float32)
    cos = jnp.asarray(cos_np)
    sin = jnp.asarray(sin_np)

    # TODO(synk): fold the (S,B,H)<->(B,S,H) transposes into the BlockSpec index
    # maps (size-1 second-minor blocks) once the kernel is activation-DMA bound.
    x_bsh = jnp.transpose(hidden_sbh, (1, 0, 2)).astype(jnp.float32)

    # ---------------- kernel A: RMSNorm1 + QKV + RoPE + flash attention ---------
    ctx = pl.pallas_call(
        functools.partial(_attn_kernel, rep=rep, head_dim=head_dim, eps=eps,
                          kv_tile=kv_tile),
        out_shape=jax.ShapeDtypeStruct((B, S, nph), bf16),
        grid_spec=pltpu.PrefetchScalarGridSpec(
            num_scalar_prefetch=0,
            # kv-group axis leading + parallel: v7x megacore splits the q/k/v
            # weight columns across its two TensorCores instead of the batch.
            grid=(kv_groups, B),
            in_specs=[
                pl.BlockSpec((1, S, H), lambda g, b: (b, 0, 0)),
                pl.BlockSpec((1, H), lambda g, b: (0, 0), **single),
                pl.BlockSpec((H, rep * head_dim), lambda g, b: (0, g)),
                pl.BlockSpec((1, rep * head_dim), lambda g, b: (0, g)),
                pl.BlockSpec((H, head_dim), lambda g, b: (0, g)),
                pl.BlockSpec((1, head_dim), lambda g, b: (0, g)),
                pl.BlockSpec((H, head_dim), lambda g, b: (0, g)),
                pl.BlockSpec((1, head_dim), lambda g, b: (0, g)),
                pl.BlockSpec((S, rh), lambda g, b: (0, 0), **single),
                pl.BlockSpec((S, rh), lambda g, b: (0, 0), **single),
            ],
            out_specs=pl.BlockSpec((1, S, rep * head_dim), lambda g, b: (b, 0, g)),
            scratch_shapes=[pltpu.VMEM((S, head_dim), bf16),     # rotated K
                            pltpu.VMEM((S, head_dim), bf16)],    # V
        ),
        compiler_params=pltpu.CompilerParams(
            dimension_semantics=("parallel", "parallel"),
            vmem_limit_bytes=vmem_limit),
    )(x_bsh, ln1_w, wq, bq, wk, bk, wv, bv, cos, sin)

    # -------- kernel B: dense proj + residual + RMSNorm2 + streamed SwiGLU ------
    n_row = S // row_tile
    n_ffn = ffn // ffn_tile
    out_bsh = pl.pallas_call(
        functools.partial(_mlp_kernel, eps=eps),
        out_shape=jax.ShapeDtypeStruct((B, S, H), out_dtype),
        grid_spec=pltpu.PrefetchScalarGridSpec(
            num_scalar_prefetch=0,
            grid=(B, n_row, n_ffn),       # FFN reduction axis last ("arbitrary")
            in_specs=[
                pl.BlockSpec((1, row_tile, nph), lambda b, s, f: (b, s, 0)),
                pl.BlockSpec((1, row_tile, H), lambda b, s, f: (b, s, 0)),
                pl.BlockSpec((nph, H), lambda b, s, f: (0, 0), **single),
                pl.BlockSpec((1, H), lambda b, s, f: (0, 0), **single),
                pl.BlockSpec((H, ffn_tile), lambda b, s, f: (0, f)),   # gate tile
                pl.BlockSpec((H, ffn_tile), lambda b, s, f: (0, f)),   # up tile
                pl.BlockSpec((ffn_tile, H), lambda b, s, f: (f, 0)),   # down tile
            ],
            out_specs=pl.BlockSpec((1, row_tile, H), lambda b, s, f: (b, s, 0)),
            scratch_shapes=[pltpu.VMEM((row_tile, H), jnp.float32),    # h1
                            pltpu.VMEM((row_tile, H), bf16),           # ln2
                            pltpu.VMEM((row_tile, H), jnp.float32)],   # FFN acc
        ),
        compiler_params=pltpu.CompilerParams(
            dimension_semantics=("parallel", "parallel", "arbitrary"),
            vmem_limit_bytes=vmem_limit),
    )(ctx, x_bsh, wd, ln2_w, w_gate, w_up, w_down)

    # use_cache=True kv_cache is dropped by the PyTorch wrapper; not materialized.
    return jnp.transpose(out_bsh, (1, 0, 2)).astype(hidden_sbh.dtype), labels


# ----------------------------------------------------------------------------
# Pure-JAX reference (same math, written the "PyTorch way") for self-check.
# ----------------------------------------------------------------------------
def glm_block_ref(hidden_sbh, params, *, num_heads, kv_groups, head_dim, eps=1e-5):
    S, B, H = hidden_sbh.shape
    x = hidden_sbh.astype(jnp.float32)
    cos_np, sin_np = rotary_cache(S, head_dim)
    cos, sin = jnp.asarray(cos_np), jnp.asarray(sin_np)

    def rms(v, w):
        var = jnp.mean(v * v, axis=-1, keepdims=True)
        return v * jax.lax.rsqrt(var + eps) * w

    ln1 = rms(x, params["ln1_w"])
    q = ln1 @ params["wq"] + params["bq"]
    k = ln1 @ params["wk"] + params["bk"]
    v = ln1 @ params["wv"] + params["bv"]
    q = q.reshape(S, B, num_heads, head_dim)
    k = k.reshape(S, B, kv_groups, head_dim)
    v = v.reshape(S, B, kv_groups, head_dim)

    def rot(t):
        rot_dim = 2 * cos.shape[-1]
        tr, tp = t[..., :rot_dim], t[..., rot_dim:]
        ts = tr.reshape(*tr.shape[:-1], rot_dim // 2, 2)
        c = cos[:, None, None, :]
        s = sin[:, None, None, :]
        o0 = ts[..., 0] * c - ts[..., 1] * s
        o1 = ts[..., 1] * c + ts[..., 0] * s
        o = jnp.stack([o0, o1], axis=-1).reshape(tr.shape)
        return jnp.concatenate([o, tp], axis=-1)

    q, k = rot(q), rot(k)
    rep = num_heads // kv_groups
    k = jnp.repeat(k, rep, axis=2)
    v = jnp.repeat(v, rep, axis=2)

    scale = 1.0 / math.sqrt(head_dim)
    scores = jnp.einsum("sbnh,tbnh->bnst", q, k) * scale
    mask = jnp.tril(jnp.ones((S, S), bool))
    scores = jnp.where(mask, scores, -1e30)
    probs = jax.nn.softmax(scores, axis=-1)
    ctx = jnp.einsum("bnst,tbnh->sbnh", probs, v).reshape(S, B, num_heads * head_dim)

    attn = ctx @ params["w_dense"]
    h1 = x + attn
    ln2 = rms(h1, params["ln2_w"])
    g = ln2 @ params["w_h_to_4h"]
    fdim = g.shape[-1] // 2
    swi = jax.nn.silu(g[..., :fdim]) * g[..., fdim:]
    return h1 + swi @ params["w_4h_to_h"]


# ----------------------------------------------------------------------------
# Deterministic synthetic parameters (shapes implied by GLMBlock __init__).
# ----------------------------------------------------------------------------
def init_params(key, hidden, num_heads, kv_groups, head_dim, ffn_hidden):
    ks = jax.random.split(key, 12)
    s = 0.02
    nph = num_heads * head_dim
    ngh = kv_groups * head_dim
    return {
        "ln1_w": 1.0 + 0.1 * jax.random.normal(ks[0], (hidden,), jnp.float32),
        "ln2_w": 1.0 + 0.1 * jax.random.normal(ks[1], (hidden,), jnp.float32),
        "wq": jax.random.normal(ks[2], (hidden, nph), jnp.float32) * s,
        "wk": jax.random.normal(ks[3], (hidden, ngh), jnp.float32) * s,
        "wv": jax.random.normal(ks[4], (hidden, ngh), jnp.float32) * s,
        "bq": jax.random.normal(ks[5], (nph,), jnp.float32) * s,
        "bk": jax.random.normal(ks[6], (ngh,), jnp.float32) * s,
        "bv": jax.random.normal(ks[7], (ngh,), jnp.float32) * s,
        "w_dense": jax.random.normal(ks[8], (nph, hidden), jnp.float32) * s,
        "w_h_to_4h": jax.random.normal(ks[9], (hidden, 2 * ffn_hidden), jnp.float32) * s,
        "w_4h_to_h": jax.random.normal(ks[10], (ffn_hidden, hidden), jnp.float32) * s,
    }


if __name__ == "__main__":
    # Small shapes consistent with the module (ChatGLM2-style head_dim=128,
    # multi-query with 2 KV groups); chosen so every streamed path (2 KV tiles,
    # 2 row tiles, 2 FFN tiles, 2 groups, 2 batches) executes >1 iteration.
    S, B = 16, 2
    num_heads, kv_groups, head_dim = 4, 2, 128
    H = num_heads * head_dim          # 512
    ffn_hidden = 256

    key = jax.random.PRNGKey(0)
    k_x, k_p = jax.random.split(key)
    hidden = jax.random.normal(k_x, (S, B, H), jnp.float32)   # [seq, batch, hidden]
    labels = jnp.zeros((B, S), jnp.int32)
    params = init_params(k_p, H, num_heads, kv_groups, head_dim, ffn_hidden)

    out, out_labels = glm_block_pipe_layer(
        (hidden, labels), params,
        num_heads=num_heads, kv_groups=kv_groups, head_dim=head_dim,
        kv_tile=8, row_tile=8, ffn_tile=128)
    out = jax.block_until_ready(out)

    ref = jax.block_until_ready(
        glm_block_ref(hidden, params, num_heads=num_heads,
                      kv_groups=kv_groups, head_dim=head_dim))

    err = float(jnp.max(jnp.abs(out - ref)))
    assert out.shape == hidden.shape and out_labels.shape == labels.shape and err < 5e-2, \
        f"max abs err {err}"
    print("KERNEL_OK")
</pallas_src>

<mosaic_0001>
module attributes {stable_mosaic.version = 11 : i64} {
  func.func @_attn_kernel(%arg0: i32, %arg1: i32, %arg2: memref<1x16x512xf32, #tpu.memory_space<vmem>>, %arg3: memref<1x512xf32, #tpu.memory_space<vmem>>, %arg4: memref<512x256xbf16, #tpu.memory_space<vmem>>, %arg5: memref<1x256xf32, #tpu.memory_space<vmem>>, %arg6: memref<512x128xbf16, #tpu.memory_space<vmem>>, %arg7: memref<1x128xf32, #tpu.memory_space<vmem>>, %arg8: memref<512x128xbf16, #tpu.memory_space<vmem>>, %arg9: memref<1x128xf32, #tpu.memory_space<vmem>>, %arg10: memref<16x32xf32, #tpu.memory_space<vmem>>, %arg11: memref<16x32xf32, #tpu.memory_space<vmem>>, %arg12: memref<1x16x256xbf16, #tpu.memory_space<vmem>>, %arg13: memref<16x128xbf16, #tpu.memory_space<vmem>>, %arg14: memref<16x128xbf16, #tpu.memory_space<vmem>>) attributes {dimension_semantics = [#tpu.dimension_semantics<parallel>, #tpu.dimension_semantics<parallel>], iteration_bounds = array<i64: 2, 2>, scalar_prefetch = 0 : i64, scratch_operands = 2 : i64, tpu.core_type = #tpu.core_type<tc>, window_params = [{transform_indices = @transform_0, window_bounds = array<i64: 1, 16, 512>}, {pipeline_mode = #tpu.pipeline_mode<synchronous>, transform_indices = @transform_1, window_bounds = array<i64: 1, 512>}, {transform_indices = @transform_2, window_bounds = array<i64: 512, 256>}, {transform_indices = @transform_3, window_bounds = array<i64: 1, 256>}, {transform_indices = @transform_4, window_bounds = array<i64: 512, 128>}, {transform_indices = @transform_5, window_bounds = array<i64: 1, 128>}, {transform_indices = @transform_6, window_bounds = array<i64: 512, 128>}, {transform_indices = @transform_7, window_bounds = array<i64: 1, 128>}, {pipeline_mode = #tpu.pipeline_mode<synchronous>, transform_indices = @transform_8, window_bounds = array<i64: 16, 32>}, {pipeline_mode = #tpu.pipeline_mode<synchronous>, transform_indices = @transform_9, window_bounds = array<i64: 16, 32>}, {transform_indices = @transform_10, window_bounds = array<i64: 1, 16, 256>}]} {
    %c0 = arith.constant 0 : index
    %c0_0 = arith.constant 0 : index
    %c0_1 = arith.constant 0 : index
    %0 = vector.load %arg2[%c0, %c0_0, %c0_1] : memref<1x16x512xf32, #tpu.memory_space<vmem>>, vector<1x16x512xf32>
    %1 = vector.shape_cast %0 : vector<1x16x512xf32> to vector<16x512xf32>
    %2 = arith.mulf %1, %1 : vector<16x512xf32>
    %cst = arith.constant dense<0.000000e+00> : vector<16xf32>
    %3 = vector.multi_reduction <add>, %2, %cst [1] : vector<16x512xf32> to vector<16xf32>
    %4 = vector.shape_cast %3 : vector<16xf32> to vector<16x1xf32>
    %cst_2 = arith.constant 5.120000e+02 : f32
    %5 = vector.broadcast %cst_2 : f32 to vector<16x1xf32>
    %6 = arith.divf %4, %5 : vector<16x1xf32>
    %cst_3 = arith.constant 9.99999974E-6 : f32
    %7 = vector.broadcast %cst_3 : f32 to vector<16x1xf32>
    %8 = arith.addf %6, %7 : vector<16x1xf32>
    %9 = math.rsqrt %8 : vector<16x1xf32>
    %10 = vector.broadcast %9 : vector<16x1xf32> to vector<16x512xf32>
    %11 = arith.mulf %1, %10 : vector<16x512xf32>
    %c0_4 = arith.constant 0 : index
    %c0_5 = arith.constant 0 : index
    %12 = vector.load %arg3[%c0_4, %c0_5] : memref<1x512xf32, #tpu.memory_space<vmem>>, vector<1x512xf32>
    %13 = vector.broadcast %12 : vector<1x512xf32> to vector<16x512xf32>
    %14 = arith.mulf %11, %13 : vector<16x512xf32>
    %15 = arith.truncf %14 : vector<16x512xf32> to vector<16x512xbf16>
    %c0_6 = arith.constant 0 : index
    %c0_7 = arith.constant 0 : index
    %16 = vector.load %arg10[%c0_6, %c0_7] : memref<16x32xf32, #tpu.memory_space<vmem>>, vector<16x32xf32>
    %c0_8 = arith.constant 0 : index
    %c0_9 = arith.constant 0 : index
    %17 = vector.load %arg11[%c0_8, %c0_9] : memref<16x32xf32, #tpu.memory_space<vmem>>, vector<16x32xf32>
    %c0_10 = arith.constant 0 : index
    %c0_11 = arith.constant 0 : index
    %18 = vector.load %arg6[%c0_10, %c0_11] : memref<512x128xbf16, #tpu.memory_space<vmem>>, vector<512x128xbf16>
    %cst_12 = arith.constant dense<0.000000e+00> : vector<16x128xf32>
    %19 = tpu.matmul %15, %18, %cst_12 {dimension_numbers = #tpu.dot_dimension_numbers<[1], [0], [0], [1], [0, 0, 1, 1], [], []>} : vector<16x512xbf16>, vector<512x128xbf16>, vector<16x128xf32> -> vector<16x128xf32>
    %c0_13 = arith.constant 0 : index
    %c0_14 = arith.constant 0 : index
    %20 = vector.load %arg7[%c0_13, %c0_14] : memref<1x128xf32, #tpu.memory_space<vmem>>, vector<1x128xf32>
    %21 = vector.broadcast %20 : vector<1x128xf32> to vector<16x128xf32>
    %22 = arith.addf %19, %21 : vector<16x128xf32>
    %c0_15 = arith.constant 0 : index
    %c0_16 = arith.constant 0 : index
    %23 = vector.load %arg8[%c0_15, %c0_16] : memref<512x128xbf16, #tpu.memory_space<vmem>>, vector<512x128xbf16>
    %cst_17 = arith.constant dense<0.000000e+00> : vector<16x128xf32>
    %24 = tpu.matmul %15, %23, %cst_17 {dimension_numbers = #tpu.dot_dimension_numbers<[1], [0], [0], [1], [0, 0, 1, 1], [], []>} : vector<16x512xbf16>, vector<512x128xbf16>, vector<16x128xf32> -> vector<16x128xf32>
    %c0_18 = arith.constant 0 : index
    %c0_19 = arith.constant 0 : index
    %25 = vector.load %arg9[%c0_18, %c0_19] : memref<1x128xf32, #tpu.memory_space<vmem>>, vector<1x128xf32>
    %26 = vector.broadcast %25 : vector<1x128xf32> to vector<16x128xf32>
    %27 = arith.addf %24, %26 : vector<16x128xf32>
    %28 = vector.extract_strided_slice %22 {offsets = [0, 0], sizes = [16, 32], strides = [1, 1]} : vector<16x128xf32> to vector<16x32xf32>
    %29 = vector.extract_strided_slice %22 {offsets = [0, 32], sizes = [16, 32], strides = [1, 1]} : vector<16x128xf32> to vector<16x32xf32>
    %30 = vector.extract_strided_slice %22 {offsets = [0, 64], sizes = [16, 64], strides = [1, 1]} : vector<16x128xf32> to vector<16x64xf32>
    %31 = arith.mulf %28, %16 : vector<16x32xf32>
    %32 = arith.mulf %29, %17 : vector<16x32xf32>
    %33 = arith.subf %31, %32 : vector<16x32xf32>
    %34 = arith.mulf %29, %16 : vector<16x32xf32>
    %35 = arith.mulf %28, %17 : vector<16x32xf32>
    %36 = arith.addf %34, %35 : vector<16x32xf32>
    %37 = tpu.concatenate %33, %36, %30 in 1 : vector<16x32xf32>, vector<16x32xf32>, vector<16x64xf32> -> vector<16x128xf32>
    %38 = arith.truncf %37 : vector<16x128xf32> to vector<16x128xbf16>
    %c0_20 = arith.constant 0 : index
    %c0_21 = arith.constant 0 : index
    %39 = vector.load %arg13[%c0_20, %c0_21] : memref<16x128xbf16, #tpu.memory_space<vmem>>, vector<16x128xbf16>
    tpu.vector_store %arg13[%c0_20, %c0_21], %38 {strides = array<i32>} : memref<16x128xbf16, #tpu.memory_space<vmem>>, vector<16x128xbf16>,
    %40 = arith.truncf %27 : vector<16x128xf32> to vector<16x128xbf16>
    %c0_22 = arith.constant 0 : index
    %c0_23 = arith.constant 0 : index
    %41 = vector.load %arg14[%c0_22, %c0_23] : memref<16x128xbf16, #tpu.memory_space<vmem>>, vector<16x128xbf16>
    tpu.vector_store %arg14[%c0_22, %c0_23], %40 {strides = array<i32>} : memref<16x128xbf16, #tpu.memory_space<vmem>>, vector<16x128xbf16>,
    %c0_24 = arith.constant 0 : index
    %c0_25 = arith.constant 0 : index
    %42 = vector.load %arg4[%c0_24, %c0_25] : memref<512x256xbf16, #tpu.memory_space<vmem>>, vector<512x256xbf16>
    %cst_26 = arith.constant dense<0.000000e+00> : vector<16x256xf32>
    %43 = tpu.matmul %15, %42, %cst_26 {dimension_numbers = #tpu.dot_dimension_numbers<[1], [0], [0], [1], [0, 0, 1, 1], [], []>} : vector<16x512xbf16>, vector<512x256xbf16>, vector<16x256xf32> -> vector<16x256xf32>
    %c0_27 = arith.constant 0 : index
    %c0_28 = arith.constant 0 : index
    %44 = vector.load %arg5[%c0_27, %c0_28] : memref<1x256xf32, #tpu.memory_space<vmem>>, vector<1x256xf32>
    %45 = vector.broadcast %44 : vector<1x256xf32> to vector<16x256xf32>
    %46 = arith.addf %43, %45 : vector<16x256xf32>
    %47 = tpu.iota {dimensions = array<i32: 0>} : vector<16x8xi32>
    %48 = tpu.iota {dimensions = array<i32: 1>} : vector<16x8xi32>
    %49 = vector.extract_strided_slice %46 {offsets = [0, 0], sizes = [16, 128], strides = [1, 1]} : vector<16x256xf32> to vector<16x128xf32>
    %50 = vector.extract_strided_slice %49 {offsets = [0, 0], sizes = [16, 32], strides = [1, 1]} : vector<16x128xf32> to vector<16x32xf32>
    %51 = vector.extract_strided_slice %49 {offsets = [0, 32], sizes = [16, 32], strides = [1, 1]} : vector<16x128xf32> to vector<16x32xf32>
    %52 = vector.extract_strided_slice %49 {offsets = [0, 64], sizes = [16, 64], strides = [1, 1]} : vector<16x128xf32> to vector<16x64xf32>
    %53 = arith.mulf %50, %16 : vector<16x32xf32>
    %54 = arith.mulf %51, %17 : vector<16x32xf32>
    %55 = arith.subf %53, %54 : vector<16x32xf32>
    %56 = arith.mulf %51, %16 : vector<16x32xf32>
    %57 = arith.mulf %50, %17 : vector<16x32xf32>
    %58 = arith.addf %56, %57 : vector<16x32xf32>
    %59 = tpu.concatenate %55, %58, %52 in 1 : vector<16x32xf32>, vector<16x32xf32>, vector<16x64xf32> -> vector<16x128xf32>
    %60 = arith.truncf %59 : vector<16x128xf32> to vector<16x128xbf16>
    %cst_29 = arith.constant -1.000000e+30 : f32
    %61 = vector.broadcast %cst_29 : f32 to vector<16x1xf32>
    %cst_30 = arith.constant 0.000000e+00 : f32
    %62 = vector.broadcast %cst_30 : f32 to vector<16x1xf32>
    %cst_31 = arith.constant 0.000000e+00 : f32
    %63 = vector.broadcast %cst_31 : f32 to vector<16x128xf32>
    %c0_i32 = arith.constant 0 : i32
    %c2_i32 = arith.constant 2 : i32
    %64 = arith.addi %c0_i32, %c2_i32 : i32
    %c1_i32 = arith.constant 1 : i32
    %65:3 = scf.for %arg15 = %c0_i32 to %64 step %c1_i32 iter_args(%arg16 = %61, %arg17 = %62, %arg18 = %63) -> (vector<16x1xf32>, vector<16x1xf32>, vector<16x128xf32>)  : i32 {
      %c8_i32 = arith.constant 8 : i32
      %97 = arith.muli %arg15, %c8_i32 : i32
      %98 = tpu.assume_multiple %97, 8 : i32
      %99 = arith.index_cast %98 : i32 to index
      %c0_45 = arith.constant 0 : index
      %100 = vector.load %arg13[%99, %c0_45] : memref<16x128xbf16, #tpu.memory_space<vmem>>, vector<8x128xbf16>
      %101 = arith.index_cast %98 : i32 to index
      %c0_46 = arith.constant 0 : index
      %102 = vector.load %arg14[%101, %c0_46] : memref<16x128xbf16, #tpu.memory_space<vmem>>, vector<8x128xbf16>
      %cst_47 = arith.constant dense<0.000000e+00> : vector<16x8xf32>
      %103 = tpu.matmul %60, %100, %cst_47 {dimension_numbers = #tpu.dot_dimension_numbers<[1], [1], [0], [0], [0, 0, 1, 0], [], []>} : vector<16x128xbf16>, vector<8x128xbf16>, vector<16x8xf32> -> vector<16x8xf32>
      %c8_i32_48 = arith.constant 8 : i32
      %104 = arith.muli %arg15, %c8_i32_48 : i32
      %105 = vector.broadcast %104 : i32 to vector<16x8xi32>
      %106 = arith.addi %105, %48 : vector<16x8xi32>
      %107 = arith.cmpi sle, %106, %47 : vector<16x8xi32>
      %cst_49 = arith.constant -1.000000e+30 : f32
      %108 = vector.broadcast %cst_49 : f32 to vector<16x8xf32>
      %109 = arith.select %107, %103, %108 : vector<16x8xi1>, vector<16x8xf32>
      %cst_50 = arith.constant dense<0xFF800000> : vector<16xf32>
      %110 = vector.multi_reduction <maximumf>, %109, %cst_50 [1] : vector<16x8xf32> to vector<16xf32>
      %111 = vector.shape_cast %110 : vector<16xf32> to vector<16x1xf32>
      %112 = arith.maximumf %arg16, %111 : vector<16x1xf32>
      %113 = arith.subf %arg16, %112 : vector<16x1xf32>
      %114 = math.exp %113 : vector<16x1xf32>
      %115 = vector.broadcast %112 : vector<16x1xf32> to vector<16x8xf32>
      %116 = arith.subf %109, %115 : vector<16x8xf32>
      %117 = math.exp %116 : vector<16x8xf32>
      %118 = arith.mulf %114, %arg17 : vector<16x1xf32>
      %cst_51 = arith.constant dense<0.000000e+00> : vector<16xf32>
      %119 = vector.multi_reduction <add>, %117, %cst_51 [1] : vector<16x8xf32> to vector<16xf32>
      %120 = vector.shape_cast %119 : vector<16xf32> to vector<16x1xf32>
      %121 = arith.addf %118, %120 : vector<16x1xf32>
      %122 = vector.broadcast %114 : vector<16x1xf32> to vector<16x128xf32>
      %123 = arith.mulf %122, %arg18 : vector<16x128xf32>
      %124 = arith.truncf %117 : vector<16x8xf32> to vector<16x8xbf16>
      %cst_52 = arith.constant dense<0.000000e+00> : vector<16x128xf32>
      %125 = tpu.matmul %124, %102, %cst_52 {dimension_numbers = #tpu.dot_dimension_numbers<[1], [0], [0], [1], [0, 0, 1, 1], [], []>} : vector<16x8xbf16>, vector<8x128xbf16>, vector<16x128xf32> -> vector<16x128xf32>
      %126 = arith.addf %123, %125 : vector<16x128xf32>
      scf.yield %112, %121, %126 : vector<16x1xf32>, vector<16x1xf32>, vector<16x128xf32>
    }
    %c2_i32_32 = arith.constant 2 : i32
    %66 = tpu.reciprocal %65#1 {approx = true} : vector<16x1xf32> -> vector<16x1xf32>
    %67 = vector.broadcast %66 : vector<16x1xf32> to vector<16x128xf32>
    %68 = arith.mulf %65#2, %67 : vector<16x128xf32>
    %69 = arith.truncf %68 : vector<16x128xf32> to vector<16x128xbf16>
    %c0_33 = arith.constant 0 : index
    %c0_34 = arith.constant 0 : index
    %c0_35 = arith.constant 0 : index
    %70 = vector.load %arg12[%c0_33, %c0_34, %c0_35] : memref<1x16x256xbf16, #tpu.memory_space<vmem>>, vector<1x16x128xbf16>
    %71 = vector.shape_cast %70 : vector<1x16x128xbf16> to vector<16x128xbf16>
    %72 = vector.shape_cast %69 : vector<16x128xbf16> to vector<1x16x128xbf16>
    tpu.vector_store %arg12[%c0_33, %c0_34, %c0_35], %72 {strides = array<i32>} : memref<1x16x256xbf16, #tpu.memory_space<vmem>>, vector<1x16x128xbf16>,
    %73 = vector.extract_strided_slice %46 {offsets = [0, 128], sizes = [16, 128], strides = [1, 1]} : vector<16x256xf32> to vector<16x128xf32>
    %74 = vector.extract_strided_slice %73 {offsets = [0, 0], sizes = [16, 32], strides = [1, 1]} : vector<16x128xf32> to vector<16x32xf32>
    %75 = vector.extract_strided_slice %73 {offsets = [0, 32], sizes = [16, 32], strides = [1, 1]} : vector<16x128xf32> to vector<16x32xf32>
    %76 = vector.extract_strided_slice %73 {offsets = [0, 64], sizes = [16, 64], strides = [1, 1]} : vector<16x128xf32> to vector<16x64xf32>
    %77 = arith.mulf %74, %16 : vector<16x32xf32>
    %78 = arith.mulf %75, %17 : vector<16x32xf32>
    %79 = arith.subf %77, %78 : vector<16x32xf32>
    %80 = arith.mulf %75, %16 : vector<16x32xf32>
    %81 = arith.mulf %74, %17 : vector<16x32xf32>
    %82 = arith.addf %80, %81 : vector<16x32xf32>
    %83 = tpu.concatenate %79, %82, %76 in 1 : vector<16x32xf32>, vector<16x32xf32>, vector<16x64xf32> -> vector<16x128xf32>
    %84 = arith.truncf %83 : vector<16x128xf32> to vector<16x128xbf16>
    %cst_36 = arith.constant -1.000000e+30 : f32
    %85 = vector.broadcast %cst_36 : f32 to vector<16x1xf32>
    %cst_37 = arith.constant 0.000000e+00 : f32
    %86 = vector.broadcast %cst_37 : f32 to vector<16x1xf32>
    %cst_38 = arith.constant 0.000000e+00 : f32
    %87 = vector.broadcast %cst_38 : f32 to vector<16x128xf32>
    %c0_i32_39 = arith.constant 0 : i32
    %c2_i32_40 = arith.constant 2 : i32
    %88 = arith.addi %c0_i32_39, %c2_i32_40 : i32
    %c1_i32_41 = arith.constant 1 : i32
    %89:3 = scf.for %arg15 = %c0_i32_39 to %88 step %c1_i32_41 iter_args(%arg16 = %85, %arg17 = %86, %arg18 = %87) -> (vector<16x1xf32>, vector<16x1xf32>, vector<16x128xf32>)  : i32 {
      %c8_i32 = arith.constant 8 : i32
      %97 = arith.muli %arg15, %c8_i32 : i32
      %98 = tpu.assume_multiple %97, 8 : i32
      %99 = arith.index_cast %98 : i32 to index
      %c0_45 = arith.constant 0 : index
      %100 = vector.load %arg13[%99, %c0_45] : memref<16x128xbf16, #tpu.memory_space<vmem>>, vector<8x128xbf16>
      %101 = arith.index_cast %98 : i32 to index
      %c0_46 = arith.constant 0 : index
      %102 = vector.load %arg14[%101, %c0_46] : memref<16x128xbf16, #tpu.memory_space<vmem>>, vector<8x128xbf16>
      %cst_47 = arith.constant dense<0.000000e+00> : vector<16x8xf32>
      %103 = tpu.matmul %84, %100, %cst_47 {dimension_numbers = #tpu.dot_dimension_numbers<[1], [1], [0], [0], [0, 0, 1, 0], [], []>} : vector<16x128xbf16>, vector<8x128xbf16>, vector<16x8xf32> -> vector<16x8xf32>
      %c8_i32_48 = arith.constant 8 : i32
      %104 = arith.muli %arg15, %c8_i32_48 : i32
      %105 = vector.broadcast %104 : i32 to vector<16x8xi32>
      %106 = arith.addi %105, %48 : vector<16x8xi32>
      %107 = arith.cmpi sle, %106, %47 : vector<16x8xi32>
      %cst_49 = arith.constant -1.000000e+30 : f32
      %108 = vector.broadcast %cst_49 : f32 to vector<16x8xf32>
      %109 = arith.select %107, %103, %108 : vector<16x8xi1>, vector<16x8xf32>
      %cst_50 = arith.constant dense<0xFF800000> : vector<16xf32>
      %110 = vector.multi_reduction <maximumf>, %109, %cst_50 [1] : vector<16x8xf32> to vector<16xf32>
      %111 = vector.shape_cast %110 : vector<16xf32> to vector<16x1xf32>
      %112 = arith.maximumf %arg16, %111 : vector<16x1xf32>
      %113 = arith.subf %arg16, %112 : vector<16x1xf32>
      %114 = math.exp %113 : vector<16x1xf32>
      %115 = vector.broadcast %112 : vector<16x1xf32> to vector<16x8xf32>
      %116 = arith.subf %109, %115 : vector<16x8xf32>
      %117 = math.exp %116 : vector<16x8xf32>
      %118 = arith.mulf %114, %arg17 : vector<16x1xf32>
      %cst_51 = arith.constant dense<0.000000e+00> : vector<16xf32>
      %119 = vector.multi_reduction <add>, %117, %cst_51 [1] : vector<16x8xf32> to vector<16xf32>
      %120 = vector.shape_cast %119 : vector<16xf32> to vector<16x1xf32>
      %121 = arith.addf %118, %120 : vector<16x1xf32>
      %122 = vector.broadcast %114 : vector<16x1xf32> to vector<16x128xf32>
      %123 = arith.mulf %122, %arg18 : vector<16x128xf32>
      %124 = arith.truncf %117 : vector<16x8xf32> to vector<16x8xbf16>
      %cst_52 = arith.constant dense<0.000000e+00> : vector<16x128xf32>
      %125 = tpu.matmul %124, %102, %cst_52 {dimension_numbers = #tpu.dot_dimension_numbers<[1], [0], [0], [1], [0, 0, 1, 1], [], []>} : vector<16x8xbf16>, vector<8x128xbf16>, vector<16x128xf32> -> vector<16x128xf32>
      %126 = arith.addf %123, %125 : vector<16x128xf32>
      scf.yield %112, %121, %126 : vector<16x1xf32>, vector<16x1xf32>, vector<16x128xf32>
    }
    %c2_i32_42 = arith.constant 2 : i32
    %90 = tpu.reciprocal %89#1 {approx = true} : vector<16x1xf32> -> vector<16x1xf32>
    %91 = vector.broadcast %90 : vector<16x1xf32> to vector<16x128xf32>
    %92 = arith.mulf %89#2, %91 : vector<16x128xf32>
    %93 = arith.truncf %92 : vector<16x128xf32> to vector<16x128xbf16>
    %c0_43 = arith.constant 0 : index
    %c0_44 = arith.constant 0 : index
    %c128 = arith.constant 128 : index
    %94 = vector.load %arg12[%c0_43, %c0_44, %c128] : memref<1x16x256xbf16, #tpu.memory_space<vmem>>, vector<1x16x128xbf16>
    %95 = vector.shape_cast %94 : vector<1x16x128xbf16> to vector<16x128xbf16>
    %96 = vector.shape_cast %93 : vector<16x128xbf16> to vector<1x16x128xbf16>
    tpu.vector_store %arg12[%c0_43, %c0_44, %c128], %96 {strides = array<i32>} : memref<1x16x256xbf16, #tpu.memory_space<vmem>>, vector<1x16x128xbf16>,
    return
  }
  func.func @transform_0(%arg0: i32, %arg1: i32) -> (i32, i32, i32) {
    %c0_i32 = arith.constant 0 : i32
    %c0_i32_0 = arith.constant 0 : i32
    %c0_i32_1 = arith.constant 0 : i32
    return %arg1, %c0_i32, %c0_i32_0 : i32, i32, i32
  }
  func.func @transform_1(%arg0: i32, %arg1: i32) -> (i32, i32) {
    %c0_i32 = arith.constant 0 : i32
    %c0_i32_0 = arith.constant 0 : i32
    %c0_i32_1 = arith.constant 0 : i32
    return %c0_i32, %c0_i32_0 : i32, i32
  }
  func.func @transform_2(%arg0: i32, %arg1: i32) -> (i32, i32) {
    %c0_i32 = arith.constant 0 : i32
    %c0_i32_0 = arith.constant 0 : i32
    return %c0_i32, %arg0 : i32, i32
  }
  func.func @transform_3(%arg0: i32, %arg1: i32) -> (i32, i32) {
    %c0_i32 = arith.constant 0 : i32
    %c0_i32_0 = arith.constant 0 : i32
    return %c0_i32, %arg0 : i32, i32
  }
  func.func @transform_4(%arg0: i32, %arg1: i32) -> (i32, i32) {
    %c0_i32 = arith.constant 0 : i32
    %c0_i32_0 = arith.constant 0 : i32
    return %c0_i32, %arg0 : i32, i32
  }
  func.func @transform_5(%arg0: i32, %arg1: i32) -> (i32, i32) {
    %c0_i32 = arith.constant 0 : i32
    %c0_i32_0 = arith.constant 0 : i32
    return %c0_i32, %arg0 : i32, i32
  }
  func.func @transform_6(%arg0: i32, %arg1: i32) -> (i32, i32) {
    %c0_i32 = arith.constant 0 : i32
    %c0_i32_0 = arith.constant 0 : i32
    return %c0_i32, %arg0 : i32, i32
  }
  func.func @transform_7(%arg0: i32, %arg1: i32) -> (i32, i32) {
    %c0_i32 = arith.constant 0 : i32
    %c0_i32_0 = arith.constant 0 : i32
    return %c0_i32, %arg0 : i32, i32
  }
  func.func @transform_8(%arg0: i32, %arg1: i32) -> (i32, i32) {
    %c0_i32 = arith.constant 0 : i32
    %c0_i32_0 = arith.constant 0 : i32
    %c0_i32_1 = arith.constant 0 : i32
    return %c0_i32, %c0_i32_0 : i32, i32
  }
  func.func @transform_9(%arg0: i32, %arg1: i32) -> (i32, i32) {
    %c0_i32 = arith.constant 0 : i32
    %c0_i32_0 = arith.constant 0 : i32
    %c0_i32_1 = arith.constant 0 : i32
    return %c0_i32, %c0_i32_0 : i32, i32
  }
  func.func @transform_10(%arg0: i32, %arg1: i32) -> (i32, i32, i32) {
    %c0_i32 = arith.constant 0 : i32
    %c0_i32_0 = arith.constant 0 : i32
    return %arg1, %c0_i32, %arg0 : i32, i32, i32
  }
}

</mosaic_0001>

<llo_original>
// kernel: tpu_custom_call.1
$region0: #{tpu_custom_call.1}
  #allocation0 [shape = 'u32[]', space=smem, size = 0x4, offset = 0x4, fixed_abs, tag = 'smem constant byte address 0x4 - core index']
  #allocation1 [shape = 'u32[144,128]{1,0:T(1,128)}', space=vmem, size = 0x12000, scoped, tag = 'internal scratch']
  #allocation2 [shape = 'bf16[16,128]{1,0:T(8,128)(2,1)}', space=vmem, size = 0x1000, scoped, tag = 'scratch operand']
  #allocation3 [shape = 'bf16[16,128]{1,0:T(8,128)(2,1)}', space=vmem, size = 0x1000, scoped, tag = 'scratch operand']
  %s0 = inlined_call_operand.hbm [shape: f32[2,16,512], index: 0, kind: input, shape index: {}]
  %s1 = inlined_call_operand.hbm [shape: f32[1,512], index: 1, kind: input, shape index: {}]
  %s2 = inlined_call_operand.hbm [shape: bf16[512,512], index: 2, kind: input, shape index: {}]
  %s3 = inlined_call_operand.hbm [shape: f32[1,512], index: 3, kind: input, shape index: {}]
  %s4 = inlined_call_operand.hbm [shape: bf16[512,256], index: 4, kind: input, shape index: {}]
  %s5 = inlined_call_operand.hbm [shape: f32[1,256], index: 5, kind: input, shape index: {}]
  %s6 = inlined_call_operand.hbm [shape: bf16[512,256], index: 6, kind: input, shape index: {}]
  %s7 = inlined_call_operand.hbm [shape: f32[1,256], index: 7, kind: input, shape index: {}]
  %s8 = inlined_call_operand.hbm [shape: f32[16,32], index: 8, kind: input, shape index: {}]
  %s9 = inlined_call_operand.vmem [shape: f32[16,32], index: 9, kind: input, shape index: {}]
  %s10 = inlined_call_operand.hbm [shape: bf16[2,16,512], index: 10, kind: output, shape index: {}]
  %s11 = sld [smem:[#allocation0]]
  $region123: #{tpu_custom_call.1} parent=0
    _
  %s13 = ssub.s32 1, %s11
  %s14 = scalar_select 0, %s13, %s11
  $region1: #{tpu_custom_call.1} parent=0
    #allocation4 [shape = 'u8[65536]{0}', space=vmem, size = 0x10000, scoped, tag = 'input window, operand 0']
    #allocation5 [shape = 's32[2]{0}', space=sflag, size = 0x8, scoped, tag = 'scoped memory for tpu_custom_call.1']
    #allocation6 [shape = 's32[2]{0}', space=sflag, size = 0x8, scoped, tag = 'scoped memory for tpu_custom_call.1']
    #allocation7 [shape = 'u8[2048]{0}', space=vmem, size = 0x800, scoped, tag = 'input window, operand 1, single buffered']
    #allocation8 [shape = 's32[1]{0}', space=sflag, size = 0x4, scoped, tag = 'scoped memory for tpu_custom_call.1']
    #allocation9 [shape = 'u8[524288]{0}', space=vmem, size = 0x80000, scoped, tag = 'input window, operand 2']
    #allocation10 [shape = 'u8[2048]{0}', space=vmem, size = 0x800, scoped, tag = 'input window, operand 3']
    #allocation11 [shape = 'u8[262144]{0}', space=vmem, size = 0x40000, scoped, tag = 'input window, operand 4']
    #allocation12 [shape = 'u8[1024]{0}', space=vmem, size = 0x400, scoped, tag = 'input window, operand 5']
    #allocation13 [shape = 'u8[262144]{0}', space=vmem, size = 0x40000, scoped, tag = 'input window, operand 6']
    #allocation14 [shape = 'u8[1024]{0}', space=vmem, size = 0x400, scoped, tag = 'input window, operand 7']
    #allocation15 [shape = 'u8[8192]{0}', space=vmem, size = 0x2000, scoped, tag = 'input window, operand 8, single buffered']
    #allocation16 [shape = 'u8[16384]{0}', space=vmem, size = 0x4000, scoped, tag = 'output window, operand 0']
    %15 = vsyncpa [#allocation5], 0
    %s16 = scalar_lea.sflag [#allocation5], 1
    %17 = vsyncpa %s16, 0
    %18 = vsyncpa [#allocation8], 0
    %19 = vsyncpa [#allocation6], 0
    %s20 = scalar_lea.sflag [#allocation6], 1
    %21 = vsyncpa %s20, 0
    loop: start=0, step=1, limit=6
    $region2: #{tpu_custom_call.1} parent=1 // loop_pre_header
      _
    $region3: #{tpu_custom_call.1} parent=1 // loop_header
      %s23 = sphi 0, %s27
      %p24 = scmp.ge.s32.totalorder %s23, 6
      %s30 = sphi 0, %s42
      %s31 = sphi 0, %s38
      %s32 = sphi 0, %s30
      %s33 = sphi 0, %s31
      %s34 = sphi 0, %s32
      %s35 = sphi 0, %s33
      %s45 = sphi 0, %s47
      %s48 = sphi 0, %s45
      %s49 = sphi 0, %s48
      %s65 = sphi 0, %s49
      %s69 = sphi 0, %s69
      %s71 = sphi 0, %s69
      %s72 = sphi 0, %s71
      %s86 = sphi 0, %s72
      %s92 = sphi 0, %s94
      %s95 = sphi 0, %s92
      %s96 = sphi 0, %s95
      %s112 = sphi 0, %s96
      %s118 = sphi 0, %s120
      %s121 = sphi 0, %s118
      %s122 = sphi 0, %s121
      %s138 = sphi 0, %s122
      %s144 = sphi 0, %s146
      %s147 = sphi 0, %s144
      %s148 = sphi 0, %s147
      %s164 = sphi 0, %s148
      %s170 = sphi 0, %s172
      %s173 = sphi 0, %s170
      %s174 = sphi 0, %s173
      %s190 = sphi 0, %s174
      %s196 = sphi 0, %s198
      %s199 = sphi 0, %s196
      %s200 = sphi 0, %s199
      %s216 = sphi 0, %s200
      %s222 = sphi 0, %s224
      %s225 = sphi 0, %s222
      %s226 = sphi 0, %s225
      %s242 = sphi 0, %s226
      %s246 = sphi 0, %s246
      %s248 = sphi 0, %s246
      %s249 = sphi 0, %s248
      %s263 = sphi 0, %s249
      %s267 = sphi 0, %s267
      %s269 = sphi 0, %s267
      %s270 = sphi 0, %s269
      %s284 = sphi 0, %s270
      %s292 = sphi 0, %s294
      %s295 = sphi 0, %s292
      %s296 = sphi 0, %s295
      %s312 = sphi 0, %s296
    $region4: #{tpu_custom_call.1} parent=1 // loop_header_branch
      %26 = sbr.rel (%p24) target = $region8
    $region5: #{tpu_custom_call.1} parent=1 // loop_body
      %s28 = ssub.s32 %s23, 1
      %s29 = ssub.s32 %s23, 2
      %s36 = sadd.s32 1, %s31
      %p37 = scmp.ge.s32.totalorder %s36, 2
      %s38 = scalar_select %p37, 0, %s36
      %s39 = sadd.s32 1, %s30
      %s40 = scalar_select %p37, %s39, %s30
      %p41 = scmp.ge.s32.totalorder %s40, 2
      %s42 = scalar_select %p41, 0, %s40
      %s43 = ssub.s32 %s31, %s38
      %p44 = scmp.eq.s32.totalorder %s43, 0
      %s46 = sadd.s32 %s45, 1
      %s47 = scalar_select %p44, %s45, %s46
      %p50 = pneg %p44
      %p51 = scmp.eq.s32.totalorder %s23, 3
      %p52 = por %p50, %p51
      %p53 = scmp.ne.s32.totalorder %s45, %s48
      %p54 = scmp.eq.s32.totalorder %s23, 0
      %p55 = por %p53, %p54
      %p56 = scmp.ne.s32.totalorder %s45, %s48
      %p57 = scmp.eq.s32.totalorder %s28, 3
      %p58 = por %p56, %p57
      %p59 = scmp.ne.s32.totalorder %s48, %s49
      %p60 = scmp.eq.s32.totalorder %s28, 0
      %p61 = por %p59, %p60
      %p62 = scmp.ne.s32.totalorder %s48, %s49
      %p63 = scmp.eq.s32.totalorder %s29, 3
      %p64 = por %p62, %p63
      %p66 = scmp.ne.s32.totalorder %s49, %s65
      %p67 = scmp.eq.s32.totalorder %s29, 0
      %p68 = por %p66, %p67
      %s70 = sadd.s32 %s69, 1
      %p73 = scmp.eq.s32.totalorder %s23, 3
      %p74 = scmp.ne.s32.totalorder %s69, %s71
      %p75 = scmp.eq.s32.totalorder %s23, 0
      %p76 = por %p74, %p75
      %p77 = scmp.ne.s32.totalorder %s69, %s71
      %p78 = scmp.eq.s32.totalorder %s28, 3
      %p79 = por %p77, %p78
      %p80 = scmp.ne.s32.totalorder %s71, %s72
      %p81 = scmp.eq.s32.totalorder %s28, 0
      %p82 = por %p80, %p81
      %p83 = scmp.ne.s32.totalorder %s71, %s72
      %p84 = scmp.eq.s32.totalorder %s29, 3
      %p85 = por %p83, %p84
      %p87 = scmp.ne.s32.totalorder %s72, %s86
      %p88 = scmp.eq.s32.totalorder %s29, 0
      %p89 = por %p87, %p88
      %s90 = ssub.s32 %s30, %s42
      %p91 = scmp.eq.s32.totalorder %s90, 0
      %s93 = sadd.s32 %s92, 1
      %s94 = scalar_select %p91, %s92, %s93
      %p97 = pneg %p91
      %p98 = scmp.eq.s32.totalorder %s23, 3
      %p99 = por %p97, %p98
      %p100 = scmp.ne.s32.totalorder %s92, %s95
      %p101 = scmp.eq.s32.totalorder %s23, 0
      %p102 = por %p100, %p101
      %p103 = scmp.ne.s32.totalorder %s92, %s95
      %p104 = scmp.eq.s32.totalorder %s28, 3
      %p105 = por %p103, %p104
      %p106 = scmp.ne.s32.totalorder %s95, %s96
      %p107 = scmp.eq.s32.totalorder %s28, 0
      %p108 = por %p106, %p107
      %p109 = scmp.ne.s32.totalorder %s95, %s96
      %p110 = scmp.eq.s32.totalorder %s29, 3
      %p111 = por %p109, %p110
      %p113 = scmp.ne.s32.totalorder %s96, %s112
      %p114 = scmp.eq.s32.totalorder %s29, 0
      %p115 = por %p113, %p114
      %s116 = ssub.s32 %s30, %s42
      %p117 = scmp.eq.s32.totalorder %s116, 0
      %s119 = sadd.s32 %s118, 1
      %s120 = scalar_select %p117, %s118, %s119
      %p123 = pneg %p117
      %p124 = scmp.eq.s32.totalorder %s23, 3
      %p125 = por %p123, %p124
      %p126 = scmp.ne.s32.totalorder %s118, %s121
      %p127 = scmp.eq.s32.totalorder %s23, 0
      %p128 = por %p126, %p127
      %p129 = scmp.ne.s32.totalorder %s118, %s121
      %p130 = scmp.eq.s32.totalorder %s28, 3
      %p131 = por %p129, %p130
      %p132 = scmp.ne.s32.totalorder %s121, %s122
      %p133 = scmp.eq.s32.totalorder %s28, 0
      %p134 = por %p132, %p133
      %p135 = scmp.ne.s32.totalorder %s121, %s122
      %p136 = scmp.eq.s32.totalorder %s29, 3
      %p137 = por %p135, %p136
      %p139 = scmp.ne.s32.totalorder %s122, %s138
      %p140 = scmp.eq.s32.totalorder %s29, 0
      %p141 = por %p139, %p140
      %s142 = ssub.s32 %s30, %s42
      %p143 = scmp.eq.s32.totalorder %s142, 0
      %s145 = sadd.s32 %s144, 1
      %s146 = scalar_select %p143, %s144, %s145
      %p149 = pneg %p143
      %p150 = scmp.eq.s32.totalorder %s23, 3
      %p151 = por %p149, %p150
      %p152 = scmp.ne.s32.totalorder %s144, %s147
      %p153 = scmp.eq.s32.totalorder %s23, 0
      %p154 = por %p152, %p153
      %p155 = scmp.ne.s32.totalorder %s144, %s147
      %p156 = scmp.eq.s32.totalorder %s28, 3
      %p157 = por %p155, %p156
      %p158 = scmp.ne.s32.totalorder %s147, %s148
      %p159 = scmp.eq.s32.totalorder %s28, 0
      %p160 = por %p158, %p159
      %p161 = scmp.ne.s32.totalorder %s147, %s148
      %p162 = scmp.eq.s32.totalorder %s29, 3
      %p163 = por %p161, %p162
      %p165 = scmp.ne.s32.totalorder %s148, %s164
      %p166 = scmp.eq.s32.totalorder %s29, 0
      %p167 = por %p165, %p166
      %s168 = ssub.s32 %s30, %s42
      %p169 = scmp.eq.s32.totalorder %s168, 0
      %s171 = sadd.s32 %s170, 1
      %s172 = scalar_select %p169, %s170, %s171
      %p175 = pneg %p169
      %p176 = scmp.eq.s32.totalorder %s23, 3
      %p177 = por %p175, %p176
      %p178 = scmp.ne.s32.totalorder %s170, %s173
      %p179 = scmp.eq.s32.totalorder %s23, 0
      %p180 = por %p178, %p179
      %p181 = scmp.ne.s32.totalorder %s170, %s173
      %p182 = scmp.eq.s32.totalorder %s28, 3
      %p183 = por %p181, %p182
      %p184 = scmp.ne.s32.totalorder %s173, %s174
      %p185 = scmp.eq.s32.totalorder %s28, 0
      %p186 = por %p184, %p185
      %p187 = scmp.ne.s32.totalorder %s173, %s174
      %p188 = scmp.eq.s32.totalorder %s29, 3
      %p189 = por %p187, %p188
      %p191 = scmp.ne.s32.totalorder %s174, %s190
      %p192 = scmp.eq.s32.totalorder %s29, 0
      %p193 = por %p191, %p192
      %s194 = ssub.s32 %s30, %s42
      %p195 = scmp.eq.s32.totalorder %s194, 0
      %s197 = sadd.s32 %s196, 1
      %s198 = scalar_select %p195, %s196, %s197
      %p201 = pneg %p195
      %p202 = scmp.eq.s32.totalorder %s23, 3
      %p203 = por %p201, %p202
      %p204 = scmp.ne.s32.totalorder %s196, %s199
      %p205 = scmp.eq.s32.totalorder %s23, 0
      %p206 = por %p204, %p205
      %p207 = scmp.ne.s32.totalorder %s196, %s199
      %p208 = scmp.eq.s32.totalorder %s28, 3
      %p209 = por %p207, %p208
      %p210 = scmp.ne.s32.totalorder %s199, %s200
      %p211 = scmp.eq.s32.totalorder %s28, 0
      %p212 = por %p210, %p211
      %p213 = scmp.ne.s32.totalorder %s199, %s200
      %p214 = scmp.eq.s32.totalorder %s29, 3
      %p215 = por %p213, %p214
      %p217 = scmp.ne.s32.totalorder %s200, %s216
      %p218 = scmp.eq.s32.totalorder %s29, 0
      %p219 = por %p217, %p218
      %s220 = ssub.s32 %s30, %s42
      %p221 = scmp.eq.s32.totalorder %s220, 0
      %s223 = sadd.s32 %s222, 1
      %s224 = scalar_select %p221, %s222, %s223
      %p227 = pneg %p221
      %p228 = scmp.eq.s32.totalorder %s23, 3
      %p229 = por %p227, %p228
      %p230 = scmp.ne.s32.totalorder %s222, %s225
      %p231 = scmp.eq.s32.totalorder %s23, 0
      %p232 = por %p230, %p231
      %p233 = scmp.ne.s32.totalorder %s222, %s225
      %p234 = scmp.eq.s32.totalorder %s28, 3
      %p235 = por %p233, %p234
      %p236 = scmp.ne.s32.totalorder %s225, %s226
      %p237 = scmp.eq.s32.totalorder %s28, 0
      %p238 = por %p236, %p237
      %p239 = scmp.ne.s32.totalorder %s225, %s226
      %p240 = scmp.eq.s32.totalorder %s29, 3
      %p241 = por %p239, %p240
      %p243 = scmp.ne.s32.totalorder %s226, %s242
      %p244 = scmp.eq.s32.totalorder %s29, 0
      %p245 = por %p243, %p244
      %s247 = sadd.s32 %s246, 1
      %p250 = scmp.eq.s32.totalorder %s23, 3
      %p251 = scmp.ne.s32.totalorder %s246, %s248
      %p252 = scmp.eq.s32.totalorder %s23, 0
      %p253 = por %p251, %p252
      %p254 = scmp.ne.s32.totalorder %s246, %s248
      %p255 = scmp.eq.s32.totalorder %s28, 3
      %p256 = por %p254, %p255
      %p257 = scmp.ne.s32.totalorder %s248, %s249
      %p258 = scmp.eq.s32.totalorder %s28, 0
      %p259 = por %p257, %p258
      %p260 = scmp.ne.s32.totalorder %s248, %s249
      %p261 = scmp.eq.s32.totalorder %s29, 3
      %p262 = por %p260, %p261
      %p264 = scmp.ne.s32.totalorder %s249, %s263
      %p265 = scmp.eq.s32.totalorder %s29, 0
      %p266 = por %p264, %p265
      %s268 = sadd.s32 %s267, 1
      %p271 = scmp.eq.s32.totalorder %s23, 3
      %p272 = scmp.ne.s32.totalorder %s267, %s269
      %p273 = scmp.eq.s32.totalorder %s23, 0
      %p274 = por %p272, %p273
      %p275 = scmp.ne.s32.totalorder %s267, %s269
      %p276 = scmp.eq.s32.totalorder %s28, 3
      %p277 = por %p275, %p276
      %p278 = scmp.ne.s32.totalorder %s269, %s270
      %p279 = scmp.eq.s32.totalorder %s28, 0
      %p280 = por %p278, %p279
      %p281 = scmp.ne.s32.totalorder %s269, %s270
      %p282 = scmp.eq.s32.totalorder %s29, 3
      %p283 = por %p281, %p282
      %p285 = scmp.ne.s32.totalorder %s270, %s284
      %p286 = scmp.eq.s32.totalorder %s29, 0
      %p287 = por %p285, %p286
      %s288 = ssub.s32 %s31, %s38
      %s289 = ssub.s32 %s30, %s42
      %s290 = sor.u32 %s288, %s289
      %p291 = scmp.eq.s32.totalorder %s290, 0
      %s293 = sadd.s32 %s292, 1
      %s294 = scalar_select %p291, %s292, %s293
      %p297 = pneg %p291
      %p298 = scmp.eq.s32.totalorder %s23, 3
      %p299 = por %p297, %p298
      %p300 = scmp.ne.s32.totalorder %s292, %s295
      %p301 = scmp.eq.s32.totalorder %s23, 0
      %p302 = por %p300, %p301
      %p303 = scmp.ne.s32.totalorder %s292, %s295
      %p304 = scmp.eq.s32.totalorder %s28, 3
      %p305 = por %p303, %p304
      %p306 = scmp.ne.s32.totalorder %s295, %s296
      %p307 = scmp.eq.s32.totalorder %s28, 0
      %p308 = por %p306, %p307
      %p309 = scmp.ne.s32.totalorder %s295, %s296
      %p310 = scmp.eq.s32.totalorder %s29, 3
      %p311 = por %p309, %p310
      %p313 = scmp.ne.s32.totalorder %s296, %s312
      %p314 = scmp.eq.s32.totalorder %s29, 0
      %p315 = por %p313, %p314
      %p316 = scmp.le.s32.totalorder 1, %s23
      %p317 = scmp.lt.s32.totalorder %s23, 5
      %p318 = pnand %p316, %p317
      %p319 = pneg %p318
      // Predicated region
      $region9: #{tpu_custom_call.1} parent=5 // pred_check
        _
      $region10: #{tpu_custom_call.1} parent=5 // pred_check_branch
        %321 = sbr.rel (%p318) target = $region12
      $region11: #{tpu_custom_call.1} parent=5 // pred_region
        %s322 = ssub.s32 %s23, 1
        // Predicated region
        $region13: #{tpu_custom_call.1} parent=11 // pred_check
          %p323 = pneg %p82
        $region14: #{tpu_custom_call.1} parent=11 // pred_check_branch
          %325 = sbr.rel (%p323) target = $region16
        $region15: #{tpu_custom_call.1} parent=11 // pred_region
          %s327 = ssub.s32 64, 64
          %328 = vsyncadd [#allocation8], %s327
          %s330 = sshll.u32 [#allocation7], 4
          %s331 = int_to_ptr.vmem [resolvable:$true] %s330
          %333 = dma.hbm_to_vmem [thread:$0]  %s1, 64, %s331, [#allocation8]
        $region16: #{tpu_custom_call.1} parent=11 // pred_fallthru
          _
        // Predicated region
        $region17: #{tpu_custom_call.1} parent=11 // pred_check
          %p334 = pneg %p259
        $region18: #{tpu_custom_call.1} parent=11 // pred_check_branch
          %336 = sbr.rel (%p334) target = $region20
        $region19: #{tpu_custom_call.1} parent=11 // pred_region
          %s338 = ssub.s32 256, 256
          %339 = vsyncadd [#allocation8], %s338
          %s340 = sshll.u32 [#allocation15], 4
          %s341 = int_to_ptr.vmem [resolvable:$true] %s340
          %346 = dma.hbm_to_vmem [thread:$0]  %s8, 256, %s341, [#allocation8], 128, 128, 8
        $region20: #{tpu_custom_call.1} parent=11 // pred_fallthru
          _
        // Predicated region
        $region21: #{tpu_custom_call.1} parent=11 // pred_check
          %p347 = pneg %p280
        $region22: #{tpu_custom_call.1} parent=11 // pred_check_branch
          %349 = sbr.rel (%p347) target = $region24
        $region23: #{tpu_custom_call.1} parent=11 // pred_region
          _
        $region24: #{tpu_custom_call.1} parent=11 // pred_fallthru
          _
      $region12: #{tpu_custom_call.1} parent=5 // pred_fallthru
        _
      %p350 = scmp.lt.s32.totalorder %s23, 4
      // Predicated region
      $region25: #{tpu_custom_call.1} parent=5 // pred_check
        %p351 = pneg %p350
      $region26: #{tpu_custom_call.1} parent=5 // pred_check_branch
        %353 = sbr.rel (%p351) target = $region28
      $region27: #{tpu_custom_call.1} parent=5 // pred_region
        // Predicated region
        $region29: #{tpu_custom_call.1} parent=27 // pred_check
          %p354 = pneg %p55
        $region30: #{tpu_custom_call.1} parent=27 // pred_check_branch
          %356 = sbr.rel (%p354) target = $region32
        $region31: #{tpu_custom_call.1} parent=27 // pred_region
          %s357 = sand.u32 %s23, 1
          %s358 = scalar_lea.sflag [#allocation5], %s357
          %s359 = sand.u32 %s45, 1
          %s360 = smul.addr %s359, 64
          %s361 = scalar_lea.vmem [#allocation4], %s360
          %s363 = ssub.s32 1024, 1024
          %364 = vsyncadd %s358, %s363
          %s365 = smul.addr %s31, 8
          %s366 = smul.addr %s365, 128
          %s367 = scalar_lea.hbm %s0, %s366
          %s368 = sshll.u32 %s361, 4
          %s369 = int_to_ptr.vmem [resolvable:$true] %s368
          %374 = dma.hbm_to_vmem [thread:$0]  %s367, 1024, %s369, %s358, 512, 512, 32
        $region32: #{tpu_custom_call.1} parent=27 // pred_fallthru
          _
        // Predicated region
        $region33: #{tpu_custom_call.1} parent=27 // pred_check
          %p375 = pneg %p102
        $region34: #{tpu_custom_call.1} parent=27 // pred_check_branch
          %377 = sbr.rel (%p375) target = $region36
        $region35: #{tpu_custom_call.1} parent=27 // pred_region
          %s378 = sand.u32 %s23, 1
          %s379 = scalar_lea.sflag [#allocation5], %s378
          %s380 = sand.u32 %s92, 1
          %s381 = smul.addr %s380, 512
          %s382 = scalar_lea.vmem [#allocation9], %s381
          %s383 = smul.u32 2, %s30
          %s385 = ssub.s32 8192, 8192
          %386 = vsyncadd %s379, %s385
          %s387 = smul.addr %s383, 64
          %s388 = scalar_lea.hbm %s2, %s387
          %s389 = sshll.u32 %s382, 4
          %s390 = int_to_ptr.vmem [resolvable:$true] %s389
          %395 = dma.hbm_to_vmem [thread:$0]  %s388, 8192, %s390, %s379, 256, 128, 8
        $region36: #{tpu_custom_call.1} parent=27 // pred_fallthru
          _
        // Predicated region
        $region37: #{tpu_custom_call.1} parent=27 // pred_check
          %p396 = pneg %p128
        $region38: #{tpu_custom_call.1} parent=27 // pred_check_branch
          %398 = sbr.rel (%p396) target = $region40
        $region39: #{tpu_custom_call.1} parent=27 // pred_region
          %s399 = sand.u32 %s23, 1
          %s400 = scalar_lea.sflag [#allocation5], %s399
          %s401 = sand.u32 %s118, 1
          %s402 = smul.addr %s401, 2
          %s403 = scalar_lea.vmem [#allocation10], %s402
          %s404 = smul.u32 2, %s30
          %s406 = ssub.s32 32, 32
          %407 = vsyncadd %s400, %s406
          %s408 = smul.addr %s404, 16
          %s409 = scalar_lea.hbm %s3, %s408
          %s411 = sshll.u32 %s403, 4
          %s412 = int_to_ptr.vmem [resolvable:$true] %s411
          %414 = dma.hbm_to_vmem [thread:$0]  %s409, 32, %s412, %s400
        $region40: #{tpu_custom_call.1} parent=27 // pred_fallthru
          _
        // Predicated region
        $region41: #{tpu_custom_call.1} parent=27 // pred_check
          %p415 = pneg %p154
        $region42: #{tpu_custom_call.1} parent=27 // pred_check_branch
          %417 = sbr.rel (%p415) target = $region44
        $region43: #{tpu_custom_call.1} parent=27 // pred_region
          %s418 = sand.u32 %s23, 1
          %s419 = scalar_lea.sflag [#allocation5], %s418
          %s420 = sand.u32 %s144, 1
          %s421 = smul.addr %s420, 256
          %s422 = scalar_lea.vmem [#allocation11], %s421
          %s424 = ssub.s32 4096, 4096
          %425 = vsyncadd %s419, %s424
          %s426 = smul.addr %s30, 64
          %s427 = scalar_lea.hbm %s4, %s426
          %s428 = sshll.u32 %s422, 4
          %s429 = int_to_ptr.vmem [resolvable:$true] %s428
          %434 = dma.hbm_to_vmem [thread:$0]  %s427, 4096, %s429, %s419, 128, 64, 4
        $region44: #{tpu_custom_call.1} parent=27 // pred_fallthru
          _
        // Predicated region
        $region45: #{tpu_custom_call.1} parent=27 // pred_check
          %p435 = pneg %p180
        $region46: #{tpu_custom_call.1} parent=27 // pred_check_branch
          %437 = sbr.rel (%p435) target = $region48
        $region47: #{tpu_custom_call.1} parent=27 // pred_region
          %s438 = sand.u32 %s23, 1
          %s439 = scalar_lea.sflag [#allocation5], %s438
          %s440 = sand.u32 %s170, 1
          %s441 = scalar_lea.vmem [#allocation12], %s440
          %s443 = ssub.s32 16, 16
          %444 = vsyncadd %s439, %s443
          %s445 = smul.addr %s30, 16
          %s446 = scalar_lea.hbm %s5, %s445
          %s448 = sshll.u32 %s441, 4
          %s449 = int_to_ptr.vmem [resolvable:$true] %s448
          %451 = dma.hbm_to_vmem [thread:$0]  %s446, 16, %s449, %s439
        $region48: #{tpu_custom_call.1} parent=27 // pred_fallthru
          _
        // Predicated region
        $region49: #{tpu_custom_call.1} parent=27 // pred_check
          %p452 = pneg %p206
        $region50: #{tpu_custom_call.1} parent=27 // pred_check_branch
          %454 = sbr.rel (%p452) target = $region52
        $region51: #{tpu_custom_call.1} parent=27 // pred_region
          %s455 = sand.u32 %s23, 1
          %s456 = scalar_lea.sflag [#allocation5], %s455
          %s457 = sand.u32 %s196, 1
          %s458 = smul.addr %s457, 256
          %s459 = scalar_lea.vmem [#allocation13], %s458
          %s461 = ssub.s32 4096, 4096
          %462 = vsyncadd %s456, %s461
          %s463 = smul.addr %s30, 64
          %s464 = scalar_lea.hbm %s6, %s463
          %s465 = sshll.u32 %s459, 4
          %s466 = int_to_ptr.vmem [resolvable:$true] %s465
          %471 = dma.hbm_to_vmem [thread:$0]  %s464, 4096, %s466, %s456, 128, 64, 4
        $region52: #{tpu_custom_call.1} parent=27 // pred_fallthru
          _
        // Predicated region
        $region53: #{tpu_custom_call.1} parent=27 // pred_check
          %p472 = pneg %p232
        $region54: #{tpu_custom_call.1} parent=27 // pred_check_branch
          %474 = sbr.rel (%p472) target = $region56
        $region55: #{tpu_custom_call.1} parent=27 // pred_region
          %s475 = sand.u32 %s23, 1
          %s476 = scalar_lea.sflag [#allocation5], %s475
          %s477 = sand.u32 %s222, 1
          %s478 = scalar_lea.vmem [#allocation14], %s477
          %s480 = ssub.s32 16, 16
          %481 = vsyncadd %s476, %s480
          %s482 = smul.addr %s30, 16
          %s483 = scalar_lea.hbm %s7, %s482
          %s485 = sshll.u32 %s478, 4
          %s486 = int_to_ptr.vmem [resolvable:$true] %s485
          %488 = dma.hbm_to_vmem [thread:$0]  %s483, 16, %s486, %s476
        $region56: #{tpu_custom_call.1} parent=27 // pred_fallthru
          _
      $region28: #{tpu_custom_call.1} parent=5 // pred_fallthru
        _
      %p489 = scmp.le.s32.totalorder 1, %s23
      %p490 = scmp.lt.s32.totalorder %s23, 5
      %p491 = pnand %p489, %p490
      %p492 = pneg %p491
      // Predicated region
      $region57: #{tpu_custom_call.1} parent=5 // pred_check
        _
      $region58: #{tpu_custom_call.1} parent=5 // pred_check_branch
        %494 = sbr.rel (%p491) target = $region60
      $region59: #{tpu_custom_call.1} parent=5 // pred_region
        %s495 = ssub.s32 %s23, 1
        %s496 = sand.u32 %s28, 1
        %s497 = scalar_lea.sflag [#allocation5], %s496
        %s498 = sand.u32 %s48, 1
        %s499 = smul.addr %s498, 64
        %s500 = scalar_lea.vmem [#allocation4], %s499
        // Predicated region
        $region61: #{tpu_custom_call.1} parent=59 // pred_check
          %p501 = pneg %p61
        $region62: #{tpu_custom_call.1} parent=59 // pred_check_branch
          %503 = sbr.rel (%p501) target = $region64
        $region63: #{tpu_custom_call.1} parent=59 // pred_region
          %504 = dma.done %s497, 1024
        $region64: #{tpu_custom_call.1} parent=59 // pred_fallthru
          _
        // Predicated region
        $region65: #{tpu_custom_call.1} parent=59 // pred_check
          %p505 = pneg %p82
        $region66: #{tpu_custom_call.1} parent=59 // pred_check_branch
          %507 = sbr.rel (%p505) target = $region68
        $region67: #{tpu_custom_call.1} parent=59 // pred_region
          %508 = dma.done [#allocation8], 64
        $region68: #{tpu_custom_call.1} parent=59 // pred_fallthru
          _
        %s509 = sand.u32 %s28, 1
        %s510 = scalar_lea.sflag [#allocation5], %s509
        %s511 = sand.u32 %s95, 1
        %s512 = smul.addr %s511, 512
        %s513 = scalar_lea.vmem [#allocation9], %s512
        // Predicated region
        $region69: #{tpu_custom_call.1} parent=59 // pred_check
          %p514 = pneg %p108
        $region70: #{tpu_custom_call.1} parent=59 // pred_check_branch
          %516 = sbr.rel (%p514) target = $region72
        $region71: #{tpu_custom_call.1} parent=59 // pred_region
          %517 = dma.done %s510, 8192
        $region72: #{tpu_custom_call.1} parent=59 // pred_fallthru
          _
        %s518 = sand.u32 %s28, 1
        %s519 = scalar_lea.sflag [#allocation5], %s518
        %s520 = sand.u32 %s121, 1
        %s521 = smul.addr %s520, 2
        %s522 = scalar_lea.vmem [#allocation10], %s521
        // Predicated region
        $region73: #{tpu_custom_call.1} parent=59 // pred_check
          %p523 = pneg %p134
        $region74: #{tpu_custom_call.1} parent=59 // pred_check_branch
          %525 = sbr.rel (%p523) target = $region76
        $region75: #{tpu_custom_call.1} parent=59 // pred_region
          %526 = dma.done %s519, 32
        $region76: #{tpu_custom_call.1} parent=59 // pred_fallthru
          _
        %s527 = sand.u32 %s28, 1
        %s528 = scalar_lea.sflag [#allocation5], %s527
        %s529 = sand.u32 %s147, 1
        %s530 = smul.addr %s529, 256
        %s531 = scalar_lea.vmem [#allocation11], %s530
        // Predicated region
        $region77: #{tpu_custom_call.1} parent=59 // pred_check
          %p532 = pneg %p160
        $region78: #{tpu_custom_call.1} parent=59 // pred_check_branch
          %534 = sbr.rel (%p532) target = $region80
        $region79: #{tpu_custom_call.1} parent=59 // pred_region
          %535 = dma.done %s528, 4096
        $region80: #{tpu_custom_call.1} parent=59 // pred_fallthru
          _
        %s536 = sand.u32 %s28, 1
        %s537 = scalar_lea.sflag [#allocation5], %s536
        %s538 = sand.u32 %s173, 1
        %s539 = scalar_lea.vmem [#allocation12], %s538
        // Predicated region
        $region81: #{tpu_custom_call.1} parent=59 // pred_check
          %p540 = pneg %p186
        $region82: #{tpu_custom_call.1} parent=59 // pred_check_branch
          %542 = sbr.rel (%p540) target = $region84
        $region83: #{tpu_custom_call.1} parent=59 // pred_region
          %543 = dma.done %s537, 16
        $region84: #{tpu_custom_call.1} parent=59 // pred_fallthru
          _
        %s544 = sand.u32 %s28, 1
        %s545 = scalar_lea.sflag [#allocation5], %s544
        %s546 = sand.u32 %s199, 1
        %s547 = smul.addr %s546, 256
        %s548 = scalar_lea.vmem [#allocation13], %s547
        // Predicated region
        $region85: #{tpu_custom_call.1} parent=59 // pred_check
          %p549 = pneg %p212
        $region86: #{tpu_custom_call.1} parent=59 // pred_check_branch
          %551 = sbr.rel (%p549) target = $region88
        $region87: #{tpu_custom_call.1} parent=59 // pred_region
          %552 = dma.done %s545, 4096
        $region88: #{tpu_custom_call.1} parent=59 // pred_fallthru
          _
        %s553 = sand.u32 %s28, 1
        %s554 = scalar_lea.sflag [#allocation5], %s553
        %s555 = sand.u32 %s225, 1
        %s556 = scalar_lea.vmem [#allocation14], %s555
        // Predicated region
        $region89: #{tpu_custom_call.1} parent=59 // pred_check
          %p557 = pneg %p238
        $region90: #{tpu_custom_call.1} parent=59 // pred_check_branch
          %559 = sbr.rel (%p557) target = $region92
        $region91: #{tpu_custom_call.1} parent=59 // pred_region
          %560 = dma.done %s554, 16
        $region92: #{tpu_custom_call.1} parent=59 // pred_fallthru
          _
        // Predicated region
        $region93: #{tpu_custom_call.1} parent=59 // pred_check
          %p561 = pneg %p259
        $region94: #{tpu_custom_call.1} parent=59 // pred_check_branch
          %563 = sbr.rel (%p561) target = $region96
        $region95: #{tpu_custom_call.1} parent=59 // pred_region
          %564 = dma.done [#allocation8], 256
        $region96: #{tpu_custom_call.1} parent=59 // pred_fallthru
          _
        %s565 = sand.u32 %s28, 1
        %s566 = scalar_lea.sflag [#allocation5], %s565
        %s567 = sand.u32 %s48, 1
        %s568 = smul.addr %s567, 64
        %s569 = scalar_lea.vmem [#allocation4], %s568
        %p570 = pneg %p61
        %p571 = pneg %p58
        %p572 = pneg %p82
        %p573 = pneg %p79
        %s574 = sand.u32 %s28, 1
        %s575 = scalar_lea.sflag [#allocation5], %s574
        %s576 = sand.u32 %s95, 1
        %s577 = smul.addr %s576, 512
        %s578 = scalar_lea.vmem [#allocation9], %s577
        %p579 = pneg %p108
        %p580 = pneg %p105
        %s581 = sand.u32 %s28, 1
        %s582 = scalar_lea.sflag [#allocation5], %s581
        %s583 = sand.u32 %s121, 1
        %s584 = smul.addr %s583, 2
        %s585 = scalar_lea.vmem [#allocation10], %s584
        %p586 = pneg %p134
        %p587 = pneg %p131
        %s588 = sand.u32 %s28, 1
        %s589 = scalar_lea.sflag [#allocation5], %s588
        %s590 = sand.u32 %s147, 1
        %s591 = smul.addr %s590, 256
        %s592 = scalar_lea.vmem [#allocation11], %s591
        %p593 = pneg %p160
        %p594 = pneg %p157
        %s595 = sand.u32 %s28, 1
        %s596 = scalar_lea.sflag [#allocation5], %s595
        %s597 = sand.u32 %s173, 1
        %s598 = scalar_lea.vmem [#allocation12], %s597
        %p599 = pneg %p186
        %p600 = pneg %p183
        %s601 = sand.u32 %s28, 1
        %s602 = scalar_lea.sflag [#allocation5], %s601
        %s603 = sand.u32 %s199, 1
        %s604 = smul.addr %s603, 256
        %s605 = scalar_lea.vmem [#allocation13], %s604
        %p606 = pneg %p212
        %p607 = pneg %p209
        %s608 = sand.u32 %s28, 1
        %s609 = scalar_lea.sflag [#allocation5], %s608
        %s610 = sand.u32 %s225, 1
        %s611 = scalar_lea.vmem [#allocation14], %s610
        %p612 = pneg %p238
        %p613 = pneg %p235
        %p614 = pneg %p259
        %p615 = pneg %p256
        %p616 = pneg %p280
        %p617 = pneg %p277
        %p618 = pneg %p308
        %p619 = pneg %p305
        %s620 = sand.u32 %s295, 1
        %s621 = scalar_lea.sflag [#allocation6], %s620
        %s622 = sand.u32 %s295, 1
        %s623 = smul.addr %s622, 16
        %s624 = scalar_lea.vmem [#allocation16], %s623
        %s625 = smul.u32 2, %s32
        %s626 = smul.u32 2, %s32
        %s627 = smul.u32 2, %s32
        %v629 = vld [vmem:[%s500] sm:$0xff]
        %v630 = vld [vmem:[%s500 + $0x8] sm:$0xff]
        %v631 = vld [vmem:[%s500 + $0x10] sm:$0xff]
        %v632 = vld [vmem:[%s500 + $0x18] sm:$0xff]
        %v633 = vld [vmem:[%s500 + $0x20] sm:$0xff]
        %v634 = vld [vmem:[%s500 + $0x28] sm:$0xff]
        %v635 = vld [vmem:[%s500 + $0x30] sm:$0xff]
        %v636 = vld [vmem:[%s500 + $0x38] sm:$0xff]
        %v637 = vmul.f32 %v629, %v629
        %v638 = vmul.f32 %v630, %v630
        %v639 = vmul.f32 %v631, %v631
        %v640 = vmul.f32 %v632, %v632
        %v641 = vmul.f32 %v633, %v633
        %v642 = vmul.f32 %v634, %v634
        %v643 = vmul.f32 %v635, %v635
        %v644 = vmul.f32 %v636, %v636
        %v645 = vadd.f32 %v637, %v638
        %v646 = vadd.f32 %v645, %v639
        %v647 = vadd.f32 %v646, %v640
        %648 = vadd.xlane.f32.xlu0 %v647
        %v649 = vpop.xlane.xlu0 %648
        %v650 = vadd.f32 %v641, %v642
        %v651 = vadd.f32 %v650, %v643
        %v652 = vadd.f32 %v651, %v644
        %653 = vadd.xlane.f32.xlu0 %v652
        %v654 = vpop.xlane.xlu0 %653
        %v655 = vrcp.pop 512.0
        %v656 = vmul.f32 %v649, %v655
        %v657 = vmul.f32 %v654, %v655
        %v658 = vadd.f32 %v656, 1e-05
        %v659 = vadd.f32 %v657, 1e-05
        %v660 = vrsqrt.pop %v658
        %v661 = vrsqrt.pop %v659
        %v662 = vmul.f32 %v629, %v660
        %v663 = vmul.f32 %v630, %v660
        %v664 = vmul.f32 %v631, %v660
        %v665 = vmul.f32 %v632, %v660
        %v666 = vmul.f32 %v633, %v661
        %v667 = vmul.f32 %v634, %v661
        %v668 = vmul.f32 %v635, %v661
        %v669 = vmul.f32 %v636, %v661
        %v670 = vld [vmem:[#allocation7] sm:$0xf]
        %v672 = vlaneseq
        %v673 = vshrl.u32 %v672, 7
        %v674 = vsub.s32 0, %v673
        %v675 = vrot.slane %v670, %v674
        %v676 = vlaneseq
        %v677 = vshrl.u32 %v676, 7
        %v678 = vsub.s32 1, %v677
        %v679 = vrot.slane %v670, %v678
        %v680 = vlaneseq
        %v681 = vshrl.u32 %v680, 7
        %v682 = vsub.s32 2, %v681
        %v683 = vrot.slane %v670, %v682
        %v684 = vlaneseq
        %v685 = vshrl.u32 %v684, 7
        %v686 = vsub.s32 3, %v685
        %v687 = vrot.slane %v670, %v686
        %v692 = vmul.f32 %v662, %v675
        %v693 = vmul.f32 %v663, %v679
        %v694 = vmul.f32 %v664, %v683
        %v695 = vmul.f32 %v665, %v687
        %v696 = vmul.f32 %v666, %v675
        %v697 = vmul.f32 %v667, %v679
        %v698 = vmul.f32 %v668, %v683
        %v699 = vmul.f32 %v669, %v687
        %v700 = vpack.c.bf16 %v696, %v692
        %v701 = vpack.c.bf16 %v697, %v693
        %v702 = vpack.c.bf16 %v698, %v694
        %v703 = vpack.c.bf16 %v699, %v695
        %v704 = vld [vmem:[#allocation15] sm:$0xff]
        %v705 = vld [vmem:[#allocation15 + $0x8] sm:$0xff]
        %v706 = vld [vmem:[%s9] sm:$0xff]
        %v707 = vld [vmem:[%s9 + $0x8] sm:$0xff]
        %v708 = vld [vmem:[%s531] sm:$0xf]
        %v709 = vld [vmem:[%s531 + $0x4] sm:$0xf]
        %v710 = vld [vmem:[%s531 + $0x8] sm:$0xf]
        %v711 = vld [vmem:[%s531 + $0xc] sm:$0xf]
        %v712 = vld [vmem:[%s531 + $0x10] sm:$0xf]
        %v713 = vld [vmem:[%s531 + $0x14] sm:$0xf]
        %v714 = vld [vmem:[%s531 + $0x18] sm:$0xf]
        %v715 = vld [vmem:[%s531 + $0x1c] sm:$0xf]
        %v716 = vld [vmem:[%s531 + $0x20] sm:$0xf]
        %v717 = vld [vmem:[%s531 + $0x24] sm:$0xf]
        %v718 = vld [vmem:[%s531 + $0x28] sm:$0xf]
        %v719 = vld [vmem:[%s531 + $0x2c] sm:$0xf]
        %v720 = vld [vmem:[%s531 + $0x30] sm:$0xf]
        %v721 = vld [vmem:[%s531 + $0x34] sm:$0xf]
        %v722 = vld [vmem:[%s531 + $0x38] sm:$0xf]
        %v723 = vld [vmem:[%s531 + $0x3c] sm:$0xf]
        %v724 = vld [vmem:[%s531 + $0x40] sm:$0xf]
        %v725 = vld [vmem:[%s531 + $0x44] sm:$0xf]
        %v726 = vld [vmem:[%s531 + $0x48] sm:$0xf]
        %v727 = vld [vmem:[%s531 + $0x4c] sm:$0xf]
        %v728 = vld [vmem:[%s531 + $0x50] sm:$0xf]
        %v729 = vld [vmem:[%s531 + $0x54] sm:$0xf]
        %v730 = vld [vmem:[%s531 + $0x58] sm:$0xf]
        %v731 = vld [vmem:[%s531 + $0x5c] sm:$0xf]
        %v732 = vld [vmem:[%s531 + $0x60] sm:$0xf]
        %v733 = vld [vmem:[%s531 + $0x64] sm:$0xf]
        %v734 = vld [vmem:[%s531 + $0x68] sm:$0xf]
        %v735 = vld [vmem:[%s531 + $0x6c] sm:$0xf]
        %v736 = vld [vmem:[%s531 + $0x70] sm:$0xf]
        %v737 = vld [vmem:[%s531 + $0x74] sm:$0xf]
        %v738 = vld [vmem:[%s531 + $0x78] sm:$0xf]
        %v739 = vld [vmem:[%s531 + $0x7c] sm:$0xf]
        %v740 = vld [vmem:[%s531 + $0x80] sm:$0xf]
        %v741 = vld [vmem:[%s531 + $0x84] sm:$0xf]
        %v742 = vld [vmem:[%s531 + $0x88] sm:$0xf]
        %v743 = vld [vmem:[%s531 + $0x8c] sm:$0xf]
        %v744 = vld [vmem:[%s531 + $0x90] sm:$0xf]
        %v745 = vld [vmem:[%s531 + $0x94] sm:$0xf]
        %v746 = vld [vmem:[%s531 + $0x98] sm:$0xf]
        %v747 = vld [vmem:[%s531 + $0x9c] sm:$0xf]
        %v748 = vld [vmem:[%s531 + $0xa0] sm:$0xf]
        %v749 = vld [vmem:[%s531 + $0xa4] sm:$0xf]
        %v750 = vld [vmem:[%s531 + $0xa8] sm:$0xf]
        %v751 = vld [vmem:[%s531 + $0xac] sm:$0xf]
        %v752 = vld [vmem:[%s531 + $0xb0] sm:$0xf]
        %v753 = vld [vmem:[%s531 + $0xb4] sm:$0xf]
        %v754 = vld [vmem:[%s531 + $0xb8] sm:$0xf]
        %v755 = vld [vmem:[%s531 + $0xbc] sm:$0xf]
        %v756 = vld [vmem:[%s531 + $0xc0] sm:$0xf]
        %v757 = vld [vmem:[%s531 + $0xc4] sm:$0xf]
        %v758 = vld [vmem:[%s531 + $0xc8] sm:$0xf]
        %v759 = vld [vmem:[%s531 + $0xcc] sm:$0xf]
        %v760 = vld [vmem:[%s531 + $0xd0] sm:$0xf]
        %v761 = vld [vmem:[%s531 + $0xd4] sm:$0xf]
        %v762 = vld [vmem:[%s531 + $0xd8] sm:$0xf]
        %v763 = vld [vmem:[%s531 + $0xdc] sm:$0xf]
        %v764 = vld [vmem:[%s531 + $0xe0] sm:$0xf]
        %v765 = vld [vmem:[%s531 + $0xe4] sm:$0xf]
        %v766 = vld [vmem:[%s531 + $0xe8] sm:$0xf]
        %v767 = vld [vmem:[%s531 + $0xec] sm:$0xf]
        %v768 = vld [vmem:[%s531 + $0xf0] sm:$0xf]
        %v769 = vld [vmem:[%s531 + $0xf4] sm:$0xf]
        %v770 = vld [vmem:[%s531 + $0xf8] sm:$0xf]
        %v771 = vld [vmem:[%s531 + $0xfc] sm:$0xf]
        %v772 = vld [vmem:[%s539] sm:$0x1]
        %v774 = vlaneseq
        %v775 = vshrl.u32 %v774, 7
        %v776 = vsub.s32 0, %v775
        %v777 = vrot.slane %v772, %v776
        %v843 = vunpack.c.l.b16 %v708
        %v844 = vunpack.c.l.b16 %v709
        %v845 = vunpack.c.l.b16 %v710
        %v846 = vunpack.c.l.b16 %v711
        %v847 = vunpack.c.l.b16 %v712
        %v848 = vunpack.c.l.b16 %v713
        %v849 = vunpack.c.l.b16 %v714
        %v850 = vunpack.c.l.b16 %v715
        %v851 = vunpack.c.l.b16 %v716
        %v852 = vunpack.c.l.b16 %v717
        %v853 = vunpack.c.l.b16 %v718
        %v854 = vunpack.c.l.b16 %v719
        %v855 = vunpack.c.l.b16 %v720
        %v856 = vunpack.c.l.b16 %v721
        %v857 = vunpack.c.l.b16 %v722
        %v858 = vunpack.c.l.b16 %v723
        %v859 = vunpack.c.l.b16 %v724
        %v860 = vunpack.c.l.b16 %v725
        %v861 = vunpack.c.l.b16 %v726
        %v862 = vunpack.c.l.b16 %v727
        %v863 = vunpack.c.l.b16 %v728
        %v864 = vunpack.c.l.b16 %v729
        %v865 = vunpack.c.l.b16 %v730
        %v866 = vunpack.c.l.b16 %v731
        %v867 = vunpack.c.l.b16 %v732
        %v868 = vunpack.c.l.b16 %v733
        %v869 = vunpack.c.l.b16 %v734
        %v870 = vunpack.c.l.b16 %v735
        %v871 = vunpack.c.l.b16 %v736
        %v872 = vunpack.c.l.b16 %v737
        %v873 = vunpack.c.l.b16 %v738
        %v874 = vunpack.c.l.b16 %v739
        %v875 = vunpack.c.l.b16 %v740
        %v876 = vunpack.c.l.b16 %v741
        %v877 = vunpack.c.l.b16 %v742
        %v878 = vunpack.c.l.b16 %v743
        %v879 = vunpack.c.l.b16 %v744
        %v880 = vunpack.c.l.b16 %v745
        %v881 = vunpack.c.l.b16 %v746
        %v882 = vunpack.c.l.b16 %v747
        %v883 = vunpack.c.l.b16 %v748
        %v884 = vunpack.c.l.b16 %v749
        %v885 = vunpack.c.l.b16 %v750
        %v886 = vunpack.c.l.b16 %v751
        %v887 = vunpack.c.l.b16 %v752
        %v888 = vunpack.c.l.b16 %v753
        %v889 = vunpack.c.l.b16 %v754
        %v890 = vunpack.c.l.b16 %v755
        %v891 = vunpack.c.l.b16 %v756
        %v892 = vunpack.c.l.b16 %v757
        %v893 = vunpack.c.l.b16 %v758
        %v894 = vunpack.c.l.b16 %v759
        %v895 = vunpack.c.l.b16 %v760
        %v896 = vunpack.c.l.b16 %v761
        %v897 = vunpack.c.l.b16 %v762
        %v898 = vunpack.c.l.b16 %v763
        %v899 = vunpack.c.l.b16 %v764
        %v900 = vunpack.c.l.b16 %v765
        %v901 = vunpack.c.l.b16 %v766
        %v902 = vunpack.c.l.b16 %v767
        %v903 = vunpack.c.l.b16 %v768
        %v904 = vunpack.c.l.b16 %v769
        %v905 = vunpack.c.l.b16 %v770
        %v906 = vunpack.c.l.b16 %v771
        %v907 = vpack.c.b16 %v844, %v843
        %v908 = vpack.c.b16 %v846, %v845
        %v909 = vpack.c.b16 %v848, %v847
        %v910 = vpack.c.b16 %v850, %v849
        %v911 = vpack.c.b16 %v852, %v851
        %v912 = vpack.c.b16 %v854, %v853
        %v913 = vpack.c.b16 %v856, %v855
        %v914 = vpack.c.b16 %v858, %v857
        %v915 = vpack.c.b16 %v860, %v859
        %v916 = vpack.c.b16 %v862, %v861
        %v917 = vpack.c.b16 %v864, %v863
        %v918 = vpack.c.b16 %v866, %v865
        %v919 = vpack.c.b16 %v868, %v867
        %v920 = vpack.c.b16 %v870, %v869
        %v921 = vpack.c.b16 %v872, %v871
        %v922 = vpack.c.b16 %v874, %v873
        %v923 = vpack.c.b16 %v876, %v875
        %v924 = vpack.c.b16 %v878, %v877
        %v925 = vpack.c.b16 %v880, %v879
        %v926 = vpack.c.b16 %v882, %v881
        %v927 = vpack.c.b16 %v884, %v883
        %v928 = vpack.c.b16 %v886, %v885
        %v929 = vpack.c.b16 %v888, %v887
        %v930 = vpack.c.b16 %v890, %v889
        %v931 = vpack.c.b16 %v892, %v891
        %v932 = vpack.c.b16 %v894, %v893
        %v933 = vpack.c.b16 %v896, %v895
        %v934 = vpack.c.b16 %v898, %v897
        %v935 = vpack.c.b16 %v900, %v899
        %v936 = vpack.c.b16 %v902, %v901
        %v937 = vpack.c.b16 %v904, %v903
        %v938 = vpack.c.b16 %v906, %v905
        %971 = vmatprep.subr.bf16.mxu0 0
        %972 = vmatpush1.bf16.msra.mxu0 %v914
        %973 = vmatprep.subr.bf16.mxu0 0
        %974 = vmatpush1.bf16.msra.mxu0 %v913
        %975 = vmatprep.subr.bf16.mxu0 0
        %976 = vmatpush1.bf16.msra.mxu0 %v912
        %977 = vmatprep.subr.bf16.mxu0 0
        %978 = vmatpush1.bf16.msra.mxu0 %v911
        %979 = vmatprep.subr.bf16.mxu0 0
        %980 = vmatpush1.bf16.msra.mxu0 %v910
        %981 = vmatprep.subr.bf16.mxu0 0
        %982 = vmatpush1.bf16.msra.mxu0 %v909
        %983 = vmatprep.subr.bf16.mxu0 0
        %984 = vmatpush1.bf16.msra.mxu0 %v908
        %985 = vmatprep.subr.bf16.mxu0 0
        %986 = vmatpush1.bf16.msra.mxu0 %v907
        %987 = vmatprep.subr.bf16.mxu0 0
        %988 = vmatpush2.bf16.msra.mxu0 %v922
        %989 = vmatprep.subr.bf16.mxu0 0
        %990 = vmatpush2.bf16.msra.mxu0 %v921
        %991 = vmatprep.subr.bf16.mxu0 0
        %992 = vmatpush2.bf16.msra.mxu0 %v920
        %993 = vmatprep.subr.bf16.mxu0 0
        %994 = vmatpush2.bf16.msra.mxu0 %v919
        %995 = vmatprep.subr.bf16.mxu0 0
        %996 = vmatpush2.bf16.msra.mxu0 %v918
        %997 = vmatprep.subr.bf16.mxu0 0
        %998 = vmatpush2.bf16.msra.mxu0 %v917
        %999 = vmatprep.subr.bf16.mxu0 0
        %1000 = vmatpush2.bf16.msra.mxu0 %v916
        %1001 = vmatprep.subr.bf16.mxu0 0
        %1002 = vmatpush2.bf16.msra.mxu0 %v915
        %1003 = vmatprep.mubr.bf16.mxu0 %v701
        %1004 = vmatmul.mubr.bf16.gmra.mxu0 %v700
        %v1005 = vpop.f32.mrf.mxu0
        %v1006 = vadd.f32 %v777, %v1005
        %v1007 = vpop.f32.mrf.mxu0
        %v1008 = vpop.f32.mrf.mxu0
        %v1009 = vadd.f32 %v777, %v1008
        %v1010 = vpop.f32.mrf.mxu0
        %1011 = vdwg.mxu0
        %1012 = vmatprep.subr.bf16.mxu0 0
        %1013 = vmatpush1.bf16.msra.mxu0 %v930
        %1014 = vmatprep.subr.bf16.mxu0 0
        %1015 = vmatpush1.bf16.msra.mxu0 %v929
        %1016 = vmatprep.subr.bf16.mxu0 0
        %1017 = vmatpush1.bf16.msra.mxu0 %v928
        %1018 = vmatprep.subr.bf16.mxu0 0
        %1019 = vmatpush1.bf16.msra.mxu0 %v927
        %1020 = vmatprep.subr.bf16.mxu0 0
        %1021 = vmatpush1.bf16.msra.mxu0 %v926
        %1022 = vmatprep.subr.bf16.mxu0 0
        %1023 = vmatpush1.bf16.msra.mxu0 %v925
        %1024 = vmatprep.subr.bf16.mxu0 0
        %1025 = vmatpush1.bf16.msra.mxu0 %v924
        %1026 = vmatprep.subr.bf16.mxu0 0
        %1027 = vmatpush1.bf16.msra.mxu0 %v923
        %1028 = vmatprep.subr.bf16.mxu0 0
        %1029 = vmatpush2.bf16.msra.mxu0 %v938
        %1030 = vmatprep.subr.bf16.mxu0 0
        %1031 = vmatpush2.bf16.msra.mxu0 %v937
        %1032 = vmatprep.subr.bf16.mxu0 0
        %1033 = vmatpush2.bf16.msra.mxu0 %v936
        %1034 = vmatprep.subr.bf16.mxu0 0
        %1035 = vmatpush2.bf16.msra.mxu0 %v935
        %1036 = vmatprep.subr.bf16.mxu0 0
        %1037 = vmatpush2.bf16.msra.mxu0 %v934
        %1038 = vmatprep.subr.bf16.mxu0 0
        %1039 = vmatpush2.bf16.msra.mxu0 %v933
        %1040 = vmatprep.subr.bf16.mxu0 0
        %1041 = vmatpush2.bf16.msra.mxu0 %v932
        %1042 = vmatprep.subr.bf16.mxu0 0
        %1043 = vmatpush2.bf16.msra.mxu0 %v931
        %1044 = vmatprep.mubr.bf16.mxu0 %v703
        %1045 = vmatmul.mubr.bf16.gmra.mxu0 %v702
        %v1046 = vpop.f32.mrf.mxu0
        %v1047 = vadd.f32 %v1006, %v1046
        %v1048 = vpop.f32.mrf.mxu0
        %v1049 = vpop.f32.mrf.mxu0
        %v1050 = vadd.f32 %v1009, %v1049
        %v1051 = vpop.f32.mrf.mxu0
        %1052 = vdwg.mxu0
        %v1053 = vld [vmem:[%s548] sm:$0xf]
        %v1054 = vld [vmem:[%s548 + $0x4] sm:$0xf]
        %v1055 = vld [vmem:[%s548 + $0x8] sm:$0xf]
        %v1056 = vld [vmem:[%s548 + $0xc] sm:$0xf]
        %v1057 = vld [vmem:[%s548 + $0x10] sm:$0xf]
        %v1058 = vld [vmem:[%s548 + $0x14] sm:$0xf]
        %v1059 = vld [vmem:[%s548 + $0x18] sm:$0xf]
        %v1060 = vld [vmem:[%s548 + $0x1c] sm:$0xf]
        %v1061 = vld [vmem:[%s548 + $0x20] sm:$0xf]
        %v1062 = vld [vmem:[%s548 + $0x24] sm:$0xf]
        %v1063 = vld [vmem:[%s548 + $0x28] sm:$0xf]
        %v1064 = vld [vmem:[%s548 + $0x2c] sm:$0xf]
        %v1065 = vld [vmem:[%s548 + $0x30] sm:$0xf]
        %v1066 = vld [vmem:[%s548 + $0x34] sm:$0xf]
        %v1067 = vld [vmem:[%s548 + $0x38] sm:$0xf]
        %v1068 = vld [vmem:[%s548 + $0x3c] sm:$0xf]
        %v1069 = vld [vmem:[%s548 + $0x40] sm:$0xf]
        %v1070 = vld [vmem:[%s548 + $0x44] sm:$0xf]
        %v1071 = vld [vmem:[%s548 + $0x48] sm:$0xf]
        %v1072 = vld [vmem:[%s548 + $0x4c] sm:$0xf]
        %v1073 = vld [vmem:[%s548 + $0x50] sm:$0xf]
        %v1074 = vld [vmem:[%s548 + $0x54] sm:$0xf]
        %v1075 = vld [vmem:[%s548 + $0x58] sm:$0xf]
        %v1076 = vld [vmem:[%s548 + $0x5c] sm:$0xf]
        %v1077 = vld [vmem:[%s548 + $0x60] sm:$0xf]
        %v1078 = vld [vmem:[%s548 + $0x64] sm:$0xf]
        %v1079 = vld [vmem:[%s548 + $0x68] sm:$0xf]
        %v1080 = vld [vmem:[%s548 + $0x6c] sm:$0xf]
        %v1081 = vld [vmem:[%s548 + $0x70] sm:$0xf]
        %v1082 = vld [vmem:[%s548 + $0x74] sm:$0xf]
        %v1083 = vld [vmem:[%s548 + $0x78] sm:$0xf]
        %v1084 = vld [vmem:[%s548 + $0x7c] sm:$0xf]
        %v1085 = vld [vmem:[%s548 + $0x80] sm:$0xf]
        %v1086 = vld [vmem:[%s548 + $0x84] sm:$0xf]
        %v1087 = vld [vmem:[%s548 + $0x88] sm:$0xf]
        %v1088 = vld [vmem:[%s548 + $0x8c] sm:$0xf]
        %v1089 = vld [vmem:[%s548 + $0x90] sm:$0xf]
        %v1090 = vld [vmem:[%s548 + $0x94] sm:$0xf]
        %v1091 = vld [vmem:[%s548 + $0x98] sm:$0xf]
        %v1092 = vld [vmem:[%s548 + $0x9c] sm:$0xf]
        %v1093 = vld [vmem:[%s548 + $0xa0] sm:$0xf]
        %v1094 = vld [vmem:[%s548 + $0xa4] sm:$0xf]
        %v1095 = vld [vmem:[%s548 + $0xa8] sm:$0xf]
        %v1096 = vld [vmem:[%s548 + $0xac] sm:$0xf]
        %v1097 = vld [vmem:[%s548 + $0xb0] sm:$0xf]
        %v1098 = vld [vmem:[%s548 + $0xb4] sm:$0xf]
        %v1099 = vld [vmem:[%s548 + $0xb8] sm:$0xf]
        %v1100 = vld [vmem:[%s548 + $0xbc] sm:$0xf]
        %v1101 = vld [vmem:[%s548 + $0xc0] sm:$0xf]
        %v1102 = vld [vmem:[%s548 + $0xc4] sm:$0xf]
        %v1103 = vld [vmem:[%s548 + $0xc8] sm:$0xf]
        %v1104 = vld [vmem:[%s548 + $0xcc] sm:$0xf]
        %v1105 = vld [vmem:[%s548 + $0xd0] sm:$0xf]
        %v1106 = vld [vmem:[%s548 + $0xd4] sm:$0xf]
        %v1107 = vld [vmem:[%s548 + $0xd8] sm:$0xf]
        %v1108 = vld [vmem:[%s548 + $0xdc] sm:$0xf]
        %v1109 = vld [vmem:[%s548 + $0xe0] sm:$0xf]
        %v1110 = vld [vmem:[%s548 + $0xe4] sm:$0xf]
        %v1111 = vld [vmem:[%s548 + $0xe8] sm:$0xf]
        %v1112 = vld [vmem:[%s548 + $0xec] sm:$0xf]
        %v1113 = vld [vmem:[%s548 + $0xf0] sm:$0xf]
        %v1114 = vld [vmem:[%s548 + $0xf4] sm:$0xf]
        %v1115 = vld [vmem:[%s548 + $0xf8] sm:$0xf]
        %v1116 = vld [vmem:[%s548 + $0xfc] sm:$0xf]
        %v1117 = vld [vmem:[%s556] sm:$0x1]
        %v1119 = vlaneseq
        %v1120 = vshrl.u32 %v1119, 7
        %v1121 = vsub.s32 0, %v1120
        %v1122 = vrot.slane %v1117, %v1121
        %v1188 = vunpack.c.l.b16 %v1053
        %v1189 = vunpack.c.l.b16 %v1054
        %v1190 = vunpack.c.l.b16 %v1055
        %v1191 = vunpack.c.l.b16 %v1056
        %v1192 = vunpack.c.l.b16 %v1057
        %v1193 = vunpack.c.l.b16 %v1058
        %v1194 = vunpack.c.l.b16 %v1059
        %v1195 = vunpack.c.l.b16 %v1060
        %v1196 = vunpack.c.l.b16 %v1061
        %v1197 = vunpack.c.l.b16 %v1062
        %v1198 = vunpack.c.l.b16 %v1063
        %v1199 = vunpack.c.l.b16 %v1064
        %v1200 = vunpack.c.l.b16 %v1065
        %v1201 = vunpack.c.l.b16 %v1066
        %v1202 = vunpack.c.l.b16 %v1067
        %v1203 = vunpack.c.l.b16 %v1068
        %v1204 = vunpack.c.l.b16 %v1069
        %v1205 = vunpack.c.l.b16 %v1070
        %v1206 = vunpack.c.l.b16 %v1071
        %v1207 = vunpack.c.l.b16 %v1072
        %v1208 = vunpack.c.l.b16 %v1073
        %v1209 = vunpack.c.l.b16 %v1074
        %v1210 = vunpack.c.l.b16 %v1075
        %v1211 = vunpack.c.l.b16 %v1076
        %v1212 = vunpack.c.l.b16 %v1077
        %v1213 = vunpack.c.l.b16 %v1078
        %v1214 = vunpack.c.l.b16 %v1079
        %v1215 = vunpack.c.l.b16 %v1080
        %v1216 = vunpack.c.l.b16 %v1081
        %v1217 = vunpack.c.l.b16 %v1082
        %v1218 = vunpack.c.l.b16 %v1083
        %v1219 = vunpack.c.l.b16 %v1084
        %v1220 = vunpack.c.l.b16 %v1085
        %v1221 = vunpack.c.l.b16 %v1086
        %v1222 = vunpack.c.l.b16 %v1087
        %v1223 = vunpack.c.l.b16 %v1088
        %v1224 = vunpack.c.l.b16 %v1089
        %v1225 = vunpack.c.l.b16 %v1090
        %v1226 = vunpack.c.l.b16 %v1091
        %v1227 = vunpack.c.l.b16 %v1092
        %v1228 = vunpack.c.l.b16 %v1093
        %v1229 = vunpack.c.l.b16 %v1094
        %v1230 = vunpack.c.l.b16 %v1095
        %v1231 = vunpack.c.l.b16 %v1096
        %v1232 = vunpack.c.l.b16 %v1097
        %v1233 = vunpack.c.l.b16 %v1098
        %v1234 = vunpack.c.l.b16 %v1099
        %v1235 = vunpack.c.l.b16 %v1100
        %v1236 = vunpack.c.l.b16 %v1101
        %v1237 = vunpack.c.l.b16 %v1102
        %v1238 = vunpack.c.l.b16 %v1103
        %v1239 = vunpack.c.l.b16 %v1104
        %v1240 = vunpack.c.l.b16 %v1105
        %v1241 = vunpack.c.l.b16 %v1106
        %v1242 = vunpack.c.l.b16 %v1107
        %v1243 = vunpack.c.l.b16 %v1108
        %v1244 = vunpack.c.l.b16 %v1109
        %v1245 = vunpack.c.l.b16 %v1110
        %v1246 = vunpack.c.l.b16 %v1111
        %v1247 = vunpack.c.l.b16 %v1112
        %v1248 = vunpack.c.l.b16 %v1113
        %v1249 = vunpack.c.l.b16 %v1114
        %v1250 = vunpack.c.l.b16 %v1115
        %v1251 = vunpack.c.l.b16 %v1116
        %v1252 = vpack.c.b16 %v1189, %v1188
        %v1253 = vpack.c.b16 %v1191, %v1190
        %v1254 = vpack.c.b16 %v1193, %v1192
        %v1255 = vpack.c.b16 %v1195, %v1194
        %v1256 = vpack.c.b16 %v1197, %v1196
        %v1257 = vpack.c.b16 %v1199, %v1198
        %v1258 = vpack.c.b16 %v1201, %v1200
        %v1259 = vpack.c.b16 %v1203, %v1202
        %v1260 = vpack.c.b16 %v1205, %v1204
        %v1261 = vpack.c.b16 %v1207, %v1206
        %v1262 = vpack.c.b16 %v1209, %v1208
        %v1263 = vpack.c.b16 %v1211, %v1210
        %v1264 = vpack.c.b16 %v1213, %v1212
        %v1265 = vpack.c.b16 %v1215, %v1214
        %v1266 = vpack.c.b16 %v1217, %v1216
        %v1267 = vpack.c.b16 %v1219, %v1218
        %v1268 = vpack.c.b16 %v1221, %v1220
        %v1269 = vpack.c.b16 %v1223, %v1222
        %v1270 = vpack.c.b16 %v1225, %v1224
        %v1271 = vpack.c.b16 %v1227, %v1226
        %v1272 = vpack.c.b16 %v1229, %v1228
        %v1273 = vpack.c.b16 %v1231, %v1230
        %v1274 = vpack.c.b16 %v1233, %v1232
        %v1275 = vpack.c.b16 %v1235, %v1234
        %v1276 = vpack.c.b16 %v1237, %v1236
        %v1277 = vpack.c.b16 %v1239, %v1238
        %v1278 = vpack.c.b16 %v1241, %v1240
        %v1279 = vpack.c.b16 %v1243, %v1242
        %v1280 = vpack.c.b16 %v1245, %v1244
        %v1281 = vpack.c.b16 %v1247, %v1246
        %v1282 = vpack.c.b16 %v1249, %v1248
        %v1283 = vpack.c.b16 %v1251, %v1250
        %1316 = vmatprep.subr.bf16.mxu0 0
        %1317 = vmatpush1.bf16.msra.mxu0 %v1259
        %1318 = vmatprep.subr.bf16.mxu0 0
        %1319 = vmatpush1.bf16.msra.mxu0 %v1258
        %1320 = vmatprep.subr.bf16.mxu0 0
        %1321 = vmatpush1.bf16.msra.mxu0 %v1257
        %1322 = vmatprep.subr.bf16.mxu0 0
        %1323 = vmatpush1.bf16.msra.mxu0 %v1256
        %1324 = vmatprep.subr.bf16.mxu0 0
        %1325 = vmatpush1.bf16.msra.mxu0 %v1255
        %1326 = vmatprep.subr.bf16.mxu0 0
        %1327 = vmatpush1.bf16.msra.mxu0 %v1254
        %1328 = vmatprep.subr.bf16.mxu0 0
        %1329 = vmatpush1.bf16.msra.mxu0 %v1253
        %1330 = vmatprep.subr.bf16.mxu0 0
        %1331 = vmatpush1.bf16.msra.mxu0 %v1252
        %1332 = vmatprep.subr.bf16.mxu0 0
        %1333 = vmatpush2.bf16.msra.mxu0 %v1267
        %1334 = vmatprep.subr.bf16.mxu0 0
        %1335 = vmatpush2.bf16.msra.mxu0 %v1266
        %1336 = vmatprep.subr.bf16.mxu0 0
        %1337 = vmatpush2.bf16.msra.mxu0 %v1265
        %1338 = vmatprep.subr.bf16.mxu0 0
        %1339 = vmatpush2.bf16.msra.mxu0 %v1264
        %1340 = vmatprep.subr.bf16.mxu0 0
        %1341 = vmatpush2.bf16.msra.mxu0 %v1263
        %1342 = vmatprep.subr.bf16.mxu0 0
        %1343 = vmatpush2.bf16.msra.mxu0 %v1262
        %1344 = vmatprep.subr.bf16.mxu0 0
        %1345 = vmatpush2.bf16.msra.mxu0 %v1261
        %1346 = vmatprep.subr.bf16.mxu0 0
        %1347 = vmatpush2.bf16.msra.mxu0 %v1260
        %1348 = vmatprep.mubr.bf16.mxu0 %v701
        %1349 = vmatmul.mubr.bf16.gmra.mxu0 %v700
        %v1350 = vpop.f32.mrf.mxu0
        %v1351 = vadd.f32 %v1122, %v1350
        %v1352 = vpop.f32.mrf.mxu0
        %v1353 = vpop.f32.mrf.mxu0
        %v1354 = vadd.f32 %v1122, %v1353
        %v1355 = vpop.f32.mrf.mxu0
        %1356 = vdwg.mxu0
        %1357 = vmatprep.subr.bf16.mxu0 0
        %1358 = vmatpush1.bf16.msra.mxu0 %v1275
        %1359 = vmatprep.subr.bf16.mxu0 0
        %1360 = vmatpush1.bf16.msra.mxu0 %v1274
        %1361 = vmatprep.subr.bf16.mxu0 0
        %1362 = vmatpush1.bf16.msra.mxu0 %v1273
        %1363 = vmatprep.subr.bf16.mxu0 0
        %1364 = vmatpush1.bf16.msra.mxu0 %v1272
        %1365 = vmatprep.subr.bf16.mxu0 0
        %1366 = vmatpush1.bf16.msra.mxu0 %v1271
        %1367 = vmatprep.subr.bf16.mxu0 0
        %1368 = vmatpush1.bf16.msra.mxu0 %v1270
        %1369 = vmatprep.subr.bf16.mxu0 0
        %1370 = vmatpush1.bf16.msra.mxu0 %v1269
        %1371 = vmatprep.subr.bf16.mxu0 0
        %1372 = vmatpush1.bf16.msra.mxu0 %v1268
        %1373 = vmatprep.subr.bf16.mxu0 0
        %1374 = vmatpush2.bf16.msra.mxu0 %v1283
        %1375 = vmatprep.subr.bf16.mxu0 0
        %1376 = vmatpush2.bf16.msra.mxu0 %v1282
        %1377 = vmatprep.subr.bf16.mxu0 0
        %1378 = vmatpush2.bf16.msra.mxu0 %v1281
        %1379 = vmatprep.subr.bf16.mxu0 0
        %1380 = vmatpush2.bf16.msra.mxu0 %v1280
        %1381 = vmatprep.subr.bf16.mxu0 0
        %1382 = vmatpush2.bf16.msra.mxu0 %v1279
        %1383 = vmatprep.subr.bf16.mxu0 0
        %1384 = vmatpush2.bf16.msra.mxu0 %v1278
        %1385 = vmatprep.subr.bf16.mxu0 0
        %1386 = vmatpush2.bf16.msra.mxu0 %v1277
        %1387 = vmatprep.subr.bf16.mxu0 0
        %1388 = vmatpush2.bf16.msra.mxu0 %v1276
        %1389 = vmatprep.mubr.bf16.mxu0 %v703
        %1390 = vmatmul.mubr.bf16.gmra.mxu0 %v702
        %v1391 = vpop.f32.mrf.mxu0
        %v1392 = vadd.f32 %v1351, %v1391
        %v1393 = vpop.f32.mrf.mxu0
        %v1394 = vpop.f32.mrf.mxu0
        %v1395 = vadd.f32 %v1354, %v1394
        %v1396 = vpop.f32.mrf.mxu0
        %1397 = vdwg.mxu0
        %v1398 = vmul.f32 %v1047, %v704
        %v1399 = vmul.f32 %v1050, %v705
        %1402 = vrot.lane.b32.xlu0 %v706, 32
        %v1403 = vpop.permute.xlu0 %1402
        %1404 = vrot.lane.b32.xlu0 %v707, 32
        %v1405 = vpop.permute.xlu0 %1404
        %v1408 = vmul.f32 %v1047, %v1403
        %v1409 = vmul.f32 %v1050, %v1405
        %1412 = vrot.lane.b32.xlu0 %v1408, 96
        %v1413 = vpop.permute.xlu0 %1412
        %1414 = vrot.lane.b32.xlu0 %v1409, 96
        %v1415 = vpop.permute.xlu0 %1414
        %v1418 = vsub.f32 %v1398, %v1413
        %v1419 = vsub.f32 %v1399, %v1415
        %1422 = vrot.lane.b32.xlu0 %v704, 32
        %v1423 = vpop.permute.xlu0 %1422
        %1424 = vrot.lane.b32.xlu0 %v705, 32
        %v1425 = vpop.permute.xlu0 %1424
        %v1428 = vmul.f32 %v1047, %v1423
        %v1429 = vmul.f32 %v1050, %v1425
        %v1430 = vmul.f32 %v1047, %v706
        %v1431 = vmul.f32 %v1050, %v707
        %1434 = vrot.lane.b32.xlu0 %v1430, 32
        %v1435 = vpop.permute.xlu0 %1434
        %1436 = vrot.lane.b32.xlu0 %v1431, 32
        %v1437 = vpop.permute.xlu0 %1436
        %v1440 = vadd.f32 %v1428, %v1435
        %v1441 = vadd.f32 %v1429, %v1437
        %vm1442 = vcmask 261120
        %v1443 = vsel %vm1442, %v1418, %v1440
        %v1444 = vsel %vm1442, %v1419, %v1441
        %vm1445 = vcmask 523264
        %v1446 = vsel %vm1445, %v1443, %v1047
        %v1447 = vsel %vm1445, %v1444, %v1050
        %v1448 = vpack.c.bf16 %v1447, %v1446
        %v1450 = vunpack.c.l.b16 %v1448
        %v1451 = vunpack.c.h.b16 %v1448
        %v1452 = vpack.c.b16 %v1450, %v1450
        %v1453 = vpack.c.b16 %v1451, %v1451
        %1456 = vst [vmem:[#allocation2] sm:$0xf] %v1452
        %1457 = vst [vmem:[#allocation2 + $0x4] sm:$0xf] %v1453
        %v1458 = vpack.c.bf16 %v1395, %v1392
        %v1460 = vunpack.c.l.b16 %v1458
        %v1461 = vunpack.c.h.b16 %v1458
        %v1462 = vpack.c.b16 %v1460, %v1460
        %v1463 = vpack.c.b16 %v1461, %v1461
        %1466 = vst [vmem:[#allocation3] sm:$0xf] %v1462
        %1467 = vst [vmem:[#allocation3 + $0x4] sm:$0xf] %v1463
        %v1468 = vld [vmem:[%s513] sm:$0xff]
        %v1469 = vld [vmem:[%s513 + $0x8] sm:$0xff]
        %v1470 = vld [vmem:[%s513 + $0x10] sm:$0xff]
        %v1471 = vld [vmem:[%s513 + $0x18] sm:$0xff]
        %v1472 = vld [vmem:[%s513 + $0x20] sm:$0xff]
        %v1473 = vld [vmem:[%s513 + $0x28] sm:$0xff]
        %v1474 = vld [vmem:[%s513 + $0x30] sm:$0xff]
        %v1475 = vld [vmem:[%s513 + $0x38] sm:$0xff]
        %v1476 = vld [vmem:[%s513 + $0x40] sm:$0xff]
        %v1477 = vld [vmem:[%s513 + $0x48] sm:$0xff]
        %v1478 = vld [vmem:[%s513 + $0x50] sm:$0xff]
        %v1479 = vld [vmem:[%s513 + $0x58] sm:$0xff]
        %v1480 = vld [vmem:[%s513 + $0x60] sm:$0xff]
        %v1481 = vld [vmem:[%s513 + $0x68] sm:$0xff]
        %v1482 = vld [vmem:[%s513 + $0x70] sm:$0xff]
        %v1483 = vld [vmem:[%s513 + $0x78] sm:$0xff]
        %v1484 = vld [vmem:[%s513 + $0x80] sm:$0xff]
        %v1485 = vld [vmem:[%s513 + $0x88] sm:$0xff]
        %v1486 = vld [vmem:[%s513 + $0x90] sm:$0xff]
        %v1487 = vld [vmem:[%s513 + $0x98] sm:$0xff]
        %v1488 = vld [vmem:[%s513 + $0xa0] sm:$0xff]
        %v1489 = vld [vmem:[%s513 + $0xa8] sm:$0xff]
        %v1490 = vld [vmem:[%s513 + $0xb0] sm:$0xff]
        %v1491 = vld [vmem:[%s513 + $0xb8] sm:$0xff]
        %v1492 = vld [vmem:[%s513 + $0xc0] sm:$0xff]
        %v1493 = vld [vmem:[%s513 + $0xc8] sm:$0xff]
        %v1494 = vld [vmem:[%s513 + $0xd0] sm:$0xff]
        %v1495 = vld [vmem:[%s513 + $0xd8] sm:$0xff]
        %v1496 = vld [vmem:[%s513 + $0xe0] sm:$0xff]
        %v1497 = vld [vmem:[%s513 + $0xe8] sm:$0xff]
        %v1498 = vld [vmem:[%s513 + $0xf0] sm:$0xff]
        %v1499 = vld [vmem:[%s513 + $0xf8] sm:$0xff]
        %v1500 = vld [vmem:[%s513 + $0x100] sm:$0xff]
        %v1501 = vld [vmem:[%s513 + $0x108] sm:$0xff]
        %v1502 = vld [vmem:[%s513 + $0x110] sm:$0xff]
        %v1503 = vld [vmem:[%s513 + $0x118] sm:$0xff]
        %v1504 = vld [vmem:[%s513 + $0x120] sm:$0xff]
        %v1505 = vld [vmem:[%s513 + $0x128] sm:$0xff]
        %v1506 = vld [vmem:[%s513 + $0x130] sm:$0xff]
        %v1507 = vld [vmem:[%s513 + $0x138] sm:$0xff]
        %v1508 = vld [vmem:[%s513 + $0x140] sm:$0xff]
        %v1509 = vld [vmem:[%s513 + $0x148] sm:$0xff]
        %v1510 = vld [vmem:[%s513 + $0x150] sm:$0xff]
        %v1511 = vld [vmem:[%s513 + $0x158] sm:$0xff]
        %v1512 = vld [vmem:[%s513 + $0x160] sm:$0xff]
        %v1513 = vld [vmem:[%s513 + $0x168] sm:$0xff]
        %v1514 = vld [vmem:[%s513 + $0x170] sm:$0xff]
        %v1515 = vld [vmem:[%s513 + $0x178] sm:$0xff]
        %v1516 = vld [vmem:[%s513 + $0x180] sm:$0xff]
        %v1517 = vld [vmem:[%s513 + $0x188] sm:$0xff]
        %v1518 = vld [vmem:[%s513 + $0x190] sm:$0xff]
        %v1519 = vld [vmem:[%s513 + $0x198] sm:$0xff]
        %v1520 = vld [vmem:[%s513 + $0x1a0] sm:$0xff]
        %v1521 = vld [vmem:[%s513 + $0x1a8] sm:$0xff]
        %v1522 = vld [vmem:[%s513 + $0x1b0] sm:$0xff]
        %v1523 = vld [vmem:[%s513 + $0x1b8] sm:$0xff]
        %v1524 = vld [vmem:[%s513 + $0x1c0] sm:$0xff]
        %v1525 = vld [vmem:[%s513 + $0x1c8] sm:$0xff]
        %v1526 = vld [vmem:[%s513 + $0x1d0] sm:$0xff]
        %v1527 = vld [vmem:[%s513 + $0x1d8] sm:$0xff]
        %v1528 = vld [vmem:[%s513 + $0x1e0] sm:$0xff]
        %v1529 = vld [vmem:[%s513 + $0x1e8] sm:$0xff]
        %v1530 = vld [vmem:[%s513 + $0x1f0] sm:$0xff]
        %v1531 = vld [vmem:[%s513 + $0x1f8] sm:$0xff]
        %v1532 = vld [vmem:[%s522] sm:$0x3]
        %v1534 = vlaneseq
        %v1535 = vshrl.u32 %v1534, 7
        %v1536 = vsub.s32 0, %v1535
        %v1537 = vrot.slane %v1532, %v1536
        %v1538 = vlaneseq
        %v1539 = vshrl.u32 %v1538, 7
        %v1540 = vsub.s32 1, %v1539
        %v1541 = vrot.slane %v1532, %v1540
        %v1608 = vunpack.c.l.b16 %v1468
        %v1609 = vunpack.c.h.b16 %v1468
        %v1610 = vunpack.c.l.b16 %v1469
        %v1611 = vunpack.c.h.b16 %v1469
        %v1612 = vunpack.c.l.b16 %v1470
        %v1613 = vunpack.c.h.b16 %v1470
        %v1614 = vunpack.c.l.b16 %v1471
        %v1615 = vunpack.c.h.b16 %v1471
        %v1616 = vunpack.c.l.b16 %v1472
        %v1617 = vunpack.c.h.b16 %v1472
        %v1618 = vunpack.c.l.b16 %v1473
        %v1619 = vunpack.c.h.b16 %v1473
        %v1620 = vunpack.c.l.b16 %v1474
        %v1621 = vunpack.c.h.b16 %v1474
        %v1622 = vunpack.c.l.b16 %v1475
        %v1623 = vunpack.c.h.b16 %v1475
        %v1624 = vunpack.c.l.b16 %v1476
        %v1625 = vunpack.c.h.b16 %v1476
        %v1626 = vunpack.c.l.b16 %v1477
        %v1627 = vunpack.c.h.b16 %v1477
        %v1628 = vunpack.c.l.b16 %v1478
        %v1629 = vunpack.c.h.b16 %v1478
        %v1630 = vunpack.c.l.b16 %v1479
        %v1631 = vunpack.c.h.b16 %v1479
        %v1632 = vunpack.c.l.b16 %v1480
        %v1633 = vunpack.c.h.b16 %v1480
        %v1634 = vunpack.c.l.b16 %v1481
        %v1635 = vunpack.c.h.b16 %v1481
        %v1636 = vunpack.c.l.b16 %v1482
        %v1637 = vunpack.c.h.b16 %v1482
        %v1638 = vunpack.c.l.b16 %v1483
        %v1639 = vunpack.c.h.b16 %v1483
        %v1640 = vunpack.c.l.b16 %v1484
        %v1641 = vunpack.c.h.b16 %v1484
        %v1642 = vunpack.c.l.b16 %v1485
        %v1643 = vunpack.c.h.b16 %v1485
        %v1644 = vunpack.c.l.b16 %v1486
        %v1645 = vunpack.c.h.b16 %v1486
        %v1646 = vunpack.c.l.b16 %v1487
        %v1647 = vunpack.c.h.b16 %v1487
        %v1648 = vunpack.c.l.b16 %v1488
        %v1649 = vunpack.c.h.b16 %v1488
        %v1650 = vunpack.c.l.b16 %v1489
        %v1651 = vunpack.c.h.b16 %v1489
        %v1652 = vunpack.c.l.b16 %v1490
        %v1653 = vunpack.c.h.b16 %v1490
        %v1654 = vunpack.c.l.b16 %v1491
        %v1655 = vunpack.c.h.b16 %v1491
        %v1656 = vunpack.c.l.b16 %v1492
        %v1657 = vunpack.c.h.b16 %v1492
        %v1658 = vunpack.c.l.b16 %v1493
        %v1659 = vunpack.c.h.b16 %v1493
        %v1660 = vunpack.c.l.b16 %v1494
        %v1661 = vunpack.c.h.b16 %v1494
        %v1662 = vunpack.c.l.b16 %v1495
        %v1663 = vunpack.c.h.b16 %v1495
        %v1664 = vunpack.c.l.b16 %v1496
        %v1665 = vunpack.c.h.b16 %v1496
        %v1666 = vunpack.c.l.b16 %v1497
        %v1667 = vunpack.c.h.b16 %v1497
        %v1668 = vunpack.c.l.b16 %v1498
        %v1669 = vunpack.c.h.b16 %v1498
        %v1670 = vunpack.c.l.b16 %v1499
        %v1671 = vunpack.c.h.b16 %v1499
        %v1672 = vunpack.c.l.b16 %v1500
        %v1673 = vunpack.c.h.b16 %v1500
        %v1674 = vunpack.c.l.b16 %v1501
        %v1675 = vunpack.c.h.b16 %v1501
        %v1676 = vunpack.c.l.b16 %v1502
        %v1677 = vunpack.c.h.b16 %v1502
        %v1678 = vunpack.c.l.b16 %v1503
        %v1679 = vunpack.c.h.b16 %v1503
        %v1680 = vunpack.c.l.b16 %v1504
        %v1681 = vunpack.c.h.b16 %v1504
        %v1682 = vunpack.c.l.b16 %v1505
        %v1683 = vunpack.c.h.b16 %v1505
        %v1684 = vunpack.c.l.b16 %v1506
        %v1685 = vunpack.c.h.b16 %v1506
        %v1686 = vunpack.c.l.b16 %v1507
        %v1687 = vunpack.c.h.b16 %v1507
        %v1688 = vunpack.c.l.b16 %v1508
        %v1689 = vunpack.c.h.b16 %v1508
        %v1690 = vunpack.c.l.b16 %v1509
        %v1691 = vunpack.c.h.b16 %v1509
        %v1692 = vunpack.c.l.b16 %v1510
        %v1693 = vunpack.c.h.b16 %v1510
        %v1694 = vunpack.c.l.b16 %v1511
        %v1695 = vunpack.c.h.b16 %v1511
        %v1696 = vunpack.c.l.b16 %v1512
        %v1697 = vunpack.c.h.b16 %v1512
        %v1698 = vunpack.c.l.b16 %v1513
        %v1699 = vunpack.c.h.b16 %v1513
        %v1700 = vunpack.c.l.b16 %v1514
        %v1701 = vunpack.c.h.b16 %v1514
        %v1702 = vunpack.c.l.b16 %v1515
        %v1703 = vunpack.c.h.b16 %v1515
        %v1704 = vunpack.c.l.b16 %v1516
        %v1705 = vunpack.c.h.b16 %v1516
        %v1706 = vunpack.c.l.b16 %v1517
        %v1707 = vunpack.c.h.b16 %v1517
        %v1708 = vunpack.c.l.b16 %v1518
        %v1709 = vunpack.c.h.b16 %v1518
        %v1710 = vunpack.c.l.b16 %v1519
        %v1711 = vunpack.c.h.b16 %v1519
        %v1712 = vunpack.c.l.b16 %v1520
        %v1713 = vunpack.c.h.b16 %v1520
        %v1714 = vunpack.c.l.b16 %v1521
        %v1715 = vunpack.c.h.b16 %v1521
        %v1716 = vunpack.c.l.b16 %v1522
        %v1717 = vunpack.c.h.b16 %v1522
        %v1718 = vunpack.c.l.b16 %v1523
        %v1719 = vunpack.c.h.b16 %v1523
        %v1720 = vunpack.c.l.b16 %v1524
        %v1721 = vunpack.c.h.b16 %v1524
        %v1722 = vunpack.c.l.b16 %v1525
        %v1723 = vunpack.c.h.b16 %v1525
        %v1724 = vunpack.c.l.b16 %v1526
        %v1725 = vunpack.c.h.b16 %v1526
        %v1726 = vunpack.c.l.b16 %v1527
        %v1727 = vunpack.c.h.b16 %v1527
        %v1728 = vunpack.c.l.b16 %v1528
        %v1729 = vunpack.c.h.b16 %v1528
        %v1730 = vunpack.c.l.b16 %v1529
        %v1731 = vunpack.c.h.b16 %v1529
        %v1732 = vunpack.c.l.b16 %v1530
        %v1733 = vunpack.c.h.b16 %v1530
        %v1734 = vunpack.c.l.b16 %v1531
        %v1735 = vunpack.c.h.b16 %v1531
        %v1736 = vpack.c.b16 %v1610, %v1608
        %v1737 = vpack.c.b16 %v1611, %v1609
        %v1738 = vpack.c.b16 %v1614, %v1612
        %v1739 = vpack.c.b16 %v1615, %v1613
        %v1740 = vpack.c.b16 %v1618, %v1616
        %v1741 = vpack.c.b16 %v1619, %v1617
        %v1742 = vpack.c.b16 %v1622, %v1620
        %v1743 = vpack.c.b16 %v1623, %v1621
        %v1744 = vpack.c.b16 %v1626, %v1624
        %v1745 = vpack.c.b16 %v1627, %v1625
        %v1746 = vpack.c.b16 %v1630, %v1628
        %v1747 = vpack.c.b16 %v1631, %v1629
        %v1748 = vpack.c.b16 %v1634, %v1632
        %v1749 = vpack.c.b16 %v1635, %v1633
        %v1750 = vpack.c.b16 %v1638, %v1636
        %v1751 = vpack.c.b16 %v1639, %v1637
        %v1752 = vpack.c.b16 %v1642, %v1640
        %v1753 = vpack.c.b16 %v1643, %v1641
        %v1754 = vpack.c.b16 %v1646, %v1644
        %v1755 = vpack.c.b16 %v1647, %v1645
        %v1756 = vpack.c.b16 %v1650, %v1648
        %v1757 = vpack.c.b16 %v1651, %v1649
        %v1758 = vpack.c.b16 %v1654, %v1652
        %v1759 = vpack.c.b16 %v1655, %v1653
        %v1760 = vpack.c.b16 %v1658, %v1656
        %v1761 = vpack.c.b16 %v1659, %v1657
        %v1762 = vpack.c.b16 %v1662, %v1660
        %v1763 = vpack.c.b16 %v1663, %v1661
        %v1764 = vpack.c.b16 %v1666, %v1664
        %v1765 = vpack.c.b16 %v1667, %v1665
        %v1766 = vpack.c.b16 %v1670, %v1668
        %v1767 = vpack.c.b16 %v1671, %v1669
        %v1768 = vpack.c.b16 %v1674, %v1672
        %v1769 = vpack.c.b16 %v1675, %v1673
        %v1770 = vpack.c.b16 %v1678, %v1676
        %v1771 = vpack.c.b16 %v1679, %v1677
        %v1772 = vpack.c.b16 %v1682, %v1680
        %v1773 = vpack.c.b16 %v1683, %v1681
        %v1774 = vpack.c.b16 %v1686, %v1684
        %v1775 = vpack.c.b16 %v1687, %v1685
        %v1776 = vpack.c.b16 %v1690, %v1688
        %v1777 = vpack.c.b16 %v1691, %v1689
        %v1778 = vpack.c.b16 %v1694, %v1692
        %v1779 = vpack.c.b16 %v1695, %v1693
        %v1780 = vpack.c.b16 %v1698, %v1696
        %v1781 = vpack.c.b16 %v1699, %v1697
        %v1782 = vpack.c.b16 %v1702, %v1700
        %v1783 = vpack.c.b16 %v1703, %v1701
        %v1784 = vpack.c.b16 %v1706, %v1704
        %v1785 = vpack.c.b16 %v1707, %v1705
        %v1786 = vpack.c.b16 %v1710, %v1708
        %v1787 = vpack.c.b16 %v1711, %v1709
        %v1788 = vpack.c.b16 %v1714, %v1712
        %v1789 = vpack.c.b16 %v1715, %v1713
        %v1790 = vpack.c.b16 %v1718, %v1716
        %v1791 = vpack.c.b16 %v1719, %v1717
        %v1792 = vpack.c.b16 %v1722, %v1720
        %v1793 = vpack.c.b16 %v1723, %v1721
        %v1794 = vpack.c.b16 %v1726, %v1724
        %v1795 = vpack.c.b16 %v1727, %v1725
        %v1796 = vpack.c.b16 %v1730, %v1728
        %v1797 = vpack.c.b16 %v1731, %v1729
        %v1798 = vpack.c.b16 %v1734, %v1732
        %v1799 = vpack.c.b16 %v1735, %v1733
        %1864 = vmatprep.subr.bf16.mxu0 %v1751
        %1865 = vmatpush1.bf16.msra.mxu0 %v1750
        %1866 = vmatprep.subr.bf16.mxu0 %v1749
        %1867 = vmatpush1.bf16.msra.mxu0 %v1748
        %1868 = vmatprep.subr.bf16.mxu0 %v1747
        %1869 = vmatpush1.bf16.msra.mxu0 %v1746
        %1870 = vmatprep.subr.bf16.mxu0 %v1745
        %1871 = vmatpush1.bf16.msra.mxu0 %v1744
        %1872 = vmatprep.subr.bf16.mxu0 %v1743
        %1873 = vmatpush1.bf16.msra.mxu0 %v1742
        %1874 = vmatprep.subr.bf16.mxu0 %v1741
        %1875 = vmatpush1.bf16.msra.mxu0 %v1740
        %1876 = vmatprep.subr.bf16.mxu0 %v1739
        %1877 = vmatpush1.bf16.msra.mxu0 %v1738
        %1878 = vmatprep.subr.bf16.mxu0 %v1737
        %1879 = vmatpush1.bf16.msra.mxu0 %v1736
        %1880 = vmatprep.subr.bf16.mxu0 %v1767
        %1881 = vmatpush2.bf16.msra.mxu0 %v1766
        %1882 = vmatprep.subr.bf16.mxu0 %v1765
        %1883 = vmatpush2.bf16.msra.mxu0 %v1764
        %1884 = vmatprep.subr.bf16.mxu0 %v1763
        %1885 = vmatpush2.bf16.msra.mxu0 %v1762
        %1886 = vmatprep.subr.bf16.mxu0 %v1761
        %1887 = vmatpush2.bf16.msra.mxu0 %v1760
        %1888 = vmatprep.subr.bf16.mxu0 %v1759
        %1889 = vmatpush2.bf16.msra.mxu0 %v1758
        %1890 = vmatprep.subr.bf16.mxu0 %v1757
        %1891 = vmatpush2.bf16.msra.mxu0 %v1756
        %1892 = vmatprep.subr.bf16.mxu0 %v1755
        %1893 = vmatpush2.bf16.msra.mxu0 %v1754
        %1894 = vmatprep.subr.bf16.mxu0 %v1753
        %1895 = vmatpush2.bf16.msra.mxu0 %v1752
        %1896 = vmatprep.mubr.bf16.mxu0 %v701
        %1897 = vmatmul.mubr.bf16.gmra.mxu0 %v700
        %v1898 = vpop.f32.mrf.mxu0
        %v1899 = vadd.f32 %v1537, %v1898
        %v1900 = vpop.f32.mrf.mxu0
        %v1901 = vadd.f32 %v1541, %v1900
        %v1902 = vpop.f32.mrf.mxu0
        %v1903 = vadd.f32 %v1537, %v1902
        %v1904 = vpop.f32.mrf.mxu0
        %v1905 = vadd.f32 %v1541, %v1904
        %1906 = vdwg.mxu0
        %1907 = vmatprep.subr.bf16.mxu0 %v1783
        %1908 = vmatpush1.bf16.msra.mxu0 %v1782
        %1909 = vmatprep.subr.bf16.mxu0 %v1781
        %1910 = vmatpush1.bf16.msra.mxu0 %v1780
        %1911 = vmatprep.subr.bf16.mxu0 %v1779
        %1912 = vmatpush1.bf16.msra.mxu0 %v1778
        %1913 = vmatprep.subr.bf16.mxu0 %v1777
        %1914 = vmatpush1.bf16.msra.mxu0 %v1776
        %1915 = vmatprep.subr.bf16.mxu0 %v1775
        %1916 = vmatpush1.bf16.msra.mxu0 %v1774
        %1917 = vmatprep.subr.bf16.mxu0 %v1773
        %1918 = vmatpush1.bf16.msra.mxu0 %v1772
        %1919 = vmatprep.subr.bf16.mxu0 %v1771
        %1920 = vmatpush1.bf16.msra.mxu0 %v1770
        %1921 = vmatprep.subr.bf16.mxu0 %v1769
        %1922 = vmatpush1.bf16.msra.mxu0 %v1768
        %1923 = vmatprep.subr.bf16.mxu0 %v1799
        %1924 = vmatpush2.bf16.msra.mxu0 %v1798
        %1925 = vmatprep.subr.bf16.mxu0 %v1797
        %1926 = vmatpush2.bf16.msra.mxu0 %v1796
        %1927 = vmatprep.subr.bf16.mxu0 %v1795
        %1928 = vmatpush2.bf16.msra.mxu0 %v1794
        %1929 = vmatprep.subr.bf16.mxu0 %v1793
        %1930 = vmatpush2.bf16.msra.mxu0 %v1792
        %1931 = vmatprep.subr.bf16.mxu0 %v1791
        %1932 = vmatpush2.bf16.msra.mxu0 %v1790
        %1933 = vmatprep.subr.bf16.mxu0 %v1789
        %1934 = vmatpush2.bf16.msra.mxu0 %v1788
        %1935 = vmatprep.subr.bf16.mxu0 %v1787
        %1936 = vmatpush2.bf16.msra.mxu0 %v1786
        %1937 = vmatprep.subr.bf16.mxu0 %v1785
        %1938 = vmatpush2.bf16.msra.mxu0 %v1784
        %1939 = vmatprep.mubr.bf16.mxu0 %v703
        %1940 = vmatmul.mubr.bf16.gmra.mxu0 %v702
        %v1941 = vpop.f32.mrf.mxu0
        %v1942 = vadd.f32 %v1899, %v1941
        %v1943 = vpop.f32.mrf.mxu0
        %v1944 = vadd.f32 %v1901, %v1943
        %v1945 = vpop.f32.mrf.mxu0
        %v1946 = vadd.f32 %v1903, %v1945
        %v1947 = vpop.f32.mrf.mxu0
        %v1948 = vadd.f32 %v1905, %v1947
        %1949 = vdwg.mxu0
        %v1950 = vlaneseq
        %v1951 = vshrl.u32 %v1950, 7
        %v1952 = vadd.s32 %v1951, 8
        %v1953 = vlaneseq
        %v1954 = vand.u32 %v1953, 127
        %v1955 = vmul.f32 %v1942, %v704
        %v1956 = vmul.f32 %v1946, %v705
        %v1957 = vmul.f32 %v1942, %v1403
        %v1958 = vmul.f32 %v1946, %v1405
        %1961 = vrot.lane.b32.xlu0 %v1957, 96
        %v1962 = vpop.permute.xlu0 %1961
        %1963 = vrot.lane.b32.xlu0 %v1958, 96
        %v1964 = vpop.permute.xlu0 %1963
        %v1967 = vsub.f32 %v1955, %v1962
        %v1968 = vsub.f32 %v1956, %v1964
        %v1969 = vmul.f32 %v1942, %v1423
        %v1970 = vmul.f32 %v1946, %v1425
        %v1971 = vmul.f32 %v1942, %v706
        %v1972 = vmul.f32 %v1946, %v707
        %1975 = vrot.lane.b32.xlu0 %v1971, 32
        %v1976 = vpop.permute.xlu0 %1975
        %1977 = vrot.lane.b32.xlu0 %v1972, 32
        %v1978 = vpop.permute.xlu0 %1977
        %v1981 = vadd.f32 %v1969, %v1976
        %v1982 = vadd.f32 %v1970, %v1978
        %v1983 = vsel %vm1442, %v1967, %v1981
        %v1984 = vsel %vm1442, %v1968, %v1982
        %v1985 = vsel %vm1445, %v1983, %v1942
        %v1986 = vsel %vm1445, %v1984, %v1946
        %v1987 = vpack.c.bf16 %v1986, %v1985
        loop: start=0, step=1, limit=2
        $region97: #{tpu_custom_call.1} parent=59 // loop_pre_header
          _
        $region98: #{tpu_custom_call.1} parent=59 // loop_header
          %s1989 = sphi 0, %s1993
          %p1990 = scmp.ge.s32.totalorder %s1989, 2
          %v1994 = vphi -1e+30, %v2063
          %v1995 = vphi -1e+30, %v2064
          %v1996 = vphi 0.0, %v2085
          %v1997 = vphi 0.0, %v2086
          %v1998 = vphi 0.0, %v2138
          %v1999 = vphi 0.0, %v2139
        $region99: #{tpu_custom_call.1} parent=59 // loop_header_branch
          %1992 = sbr.rel (%p1990) target = $region103
        $region100: #{tpu_custom_call.1} parent=59 // loop_body
          %s2000 = smul.u32 %s1989, 8
          %s2001 = sshra.s32 %s2000, 3
          %s2002 = sand.u32 %s2000, 7
          %s2003 = smul.addr %s2001, 4
          %s2004 = scalar_lea.vmem [#allocation2], %s2003
          %v2005 = vld [vmem:[%s2004] sm:$0xf]
          %s2006 = smul.addr %s2001, 4
          %s2007 = scalar_lea.vmem [#allocation3], %s2006
          %v2008 = vld [vmem:[%s2007] sm:$0xf]
          %2009 = vmatprep.subr.bf16.mxu0 0
          %2010 = vmatpush1.bf16.xpose.msra.mxu0 0
          %2011 = vmatprep.subr.bf16.mxu0 0
          %2012 = vmatpush1.bf16.xpose.msra.mxu0 0
          %2013 = vmatprep.subr.bf16.mxu0 0
          %2014 = vmatpush1.bf16.xpose.msra.mxu0 0
          %2015 = vmatprep.subr.bf16.mxu0 0
          %2016 = vmatpush1.bf16.xpose.msra.mxu0 0
          %2017 = vmatprep.subr.bf16.mxu0 0
          %2018 = vmatpush1.bf16.xpose.msra.mxu0 0
          %2019 = vmatprep.subr.bf16.mxu0 0
          %2020 = vmatpush1.bf16.xpose.msra.mxu0 0
          %2021 = vmatprep.subr.bf16.mxu0 0
          %2022 = vmatpush1.bf16.xpose.msra.mxu0 0
          %2023 = vmatprep.subr.bf16.mxu0 0
          %2024 = vmatpush1.bf16.xpose.msra.mxu0 %v2005
          %2025 = vmatprep.subr.bf16.mxu0 0
          %2026 = vmatpush2.bf16.xpose.msra.mxu0 0
          %2027 = vmatprep.subr.bf16.mxu0 0
          %2028 = vmatpush2.bf16.xpose.msra.mxu0 0
          %2029 = vmatprep.subr.bf16.mxu0 0
          %2030 = vmatpush2.bf16.xpose.msra.mxu0 0
          %2031 = vmatprep.subr.bf16.mxu0 0
          %2032 = vmatpush2.bf16.xpose.msra.mxu0 0
          %2033 = vmatprep.subr.bf16.mxu0 0
          %2034 = vmatpush2.bf16.xpose.msra.mxu0 0
          %2035 = vmatprep.subr.bf16.mxu0 0
          %2036 = vmatpush2.bf16.xpose.msra.mxu0 0
          %2037 = vmatprep.subr.bf16.mxu0 0
          %2038 = vmatpush2.bf16.xpose.msra.mxu0 0
          %2039 = vmatprep.subr.bf16.mxu0 0
          %2040 = vmatpush2.bf16.xpose.msra.mxu0 0
          %2041 = vmatprep.mubr.bf16.mxu0 0
          %2042 = vmatmul.mubr.bf16.gmra.mxu0 %v1987
          %v2043 = vpop.f32.mrf.mxu0
          %v2044 = vadd.f32 0.0, %v2043
          %v2045 = vpop.f32.mrf.mxu0
          %v2046 = vpop.f32.mrf.mxu0
          %v2047 = vadd.f32 0.0, %v2046
          %v2048 = vpop.f32.mrf.mxu0
          %2049 = vdwg.mxu0
          %v2050 = vstv %s2000
          %v2051 = vadd.s32 %v2050, %v1954
          %vm2052 = vcmp.le.s32.totalorder %v2051, %v1951
          %vm2053 = vcmp.le.s32.totalorder %v2051, %v1952
          %v2054 = vsel %vm2052, %v2044, -1e+30
          %v2055 = vsel %vm2053, %v2047, -1e+30
          %vm2056 = vcmask 64512
          %v2057 = vsel %vm2056, %v2054, -inf
          %2058 = vmax.xlane.f32.xlu0 %v2057
          %v2059 = vpop.xlane.xlu0 %2058
          %v2060 = vsel %vm2056, %v2055, -inf
          %2061 = vmax.xlane.f32.xlu0 %v2060
          %v2062 = vpop.xlane.xlu0 %2061
          %v2063 = vmax.f32 %v1994, %v2059
          %v2064 = vmax.f32 %v1995, %v2062
          %v2065 = vsub.f32 %v1994, %v2063
          %v2066 = vsub.f32 %v1995, %v2064
          %v2067 = vmul.f32 %v2065, 1.442695
          %v2068 = vpow.pop %v2067
          %v2069 = vmul.f32 %v2066, 1.442695
          %v2070 = vpow.pop %v2069
          %v2071 = vsub.f32 %v2054, %v2063
          %v2072 = vsub.f32 %v2055, %v2064
          %v2073 = vmul.f32 %v2071, 1.442695
          %v2074 = vpow.pop %v2073
          %v2075 = vmul.f32 %v2072, 1.442695
          %v2076 = vpow.pop %v2075
          %v2077 = vmul.f32 %v2068, %v1996
          %v2078 = vmul.f32 %v2070, %v1997
          %v2079 = vsel %vm2056, %v2074, 0.0
          %2080 = vadd.xlane.f32.xlu0 %v2079
          %v2081 = vpop.xlane.xlu0 %2080
          %v2082 = vsel %vm2056, %v2076, 0.0
          %2083 = vadd.xlane.f32.xlu0 %v2082
          %v2084 = vpop.xlane.xlu0 %2083
          %v2085 = vadd.f32 %v2077, %v2081
          %v2086 = vadd.f32 %v2078, %v2084
          %v2087 = vmul.f32 %v2068, %v1998
          %v2088 = vmul.f32 %v2070, %v1999
          %v2089 = vpack.c.bf16 %v2076, %v2074
          %v2091 = vsel %vm2056, %v2089, 0
          %vm2093 = vcmask 1043456
          %v2095 = vsel %vm2093, %v2008, 0
          %2097 = vmatprep.subr.bf16.mxu0 0
          %2098 = vmatpush1.bf16.msra.mxu0 0
          %2099 = vmatprep.subr.bf16.mxu0 0
          %2100 = vmatpush1.bf16.msra.mxu0 0
          %2101 = vmatprep.subr.bf16.mxu0 0
          %2102 = vmatpush1.bf16.msra.mxu0 0
          %2103 = vmatprep.subr.bf16.mxu0 0
          %2104 = vmatpush1.bf16.msra.mxu0 0
          %2105 = vmatprep.subr.bf16.mxu0 0
          %2106 = vmatpush1.bf16.msra.mxu0 0
          %2107 = vmatprep.subr.bf16.mxu0 0
          %2108 = vmatpush1.bf16.msra.mxu0 0
          %2109 = vmatprep.subr.bf16.mxu0 0
          %2110 = vmatpush1.bf16.msra.mxu0 0
          %2111 = vmatprep.subr.bf16.mxu0 0
          %2112 = vmatpush1.bf16.msra.mxu0 %v2095
          %2113 = vmatprep.subr.bf16.mxu0 0
          %2114 = vmatpush2.bf16.msra.mxu0 0
          %2115 = vmatprep.subr.bf16.mxu0 0
          %2116 = vmatpush2.bf16.msra.mxu0 0
          %2117 = vmatprep.subr.bf16.mxu0 0
          %2118 = vmatpush2.bf16.msra.mxu0 0
          %2119 = vmatprep.subr.bf16.mxu0 0
          %2120 = vmatpush2.bf16.msra.mxu0 0
          %2121 = vmatprep.subr.bf16.mxu0 0
          %2122 = vmatpush2.bf16.msra.mxu0 0
          %2123 = vmatprep.subr.bf16.mxu0 0
          %2124 = vmatpush2.bf16.msra.mxu0 0
          %2125 = vmatprep.subr.bf16.mxu0 0
          %2126 = vmatpush2.bf16.msra.mxu0 0
          %2127 = vmatprep.subr.bf16.mxu0 0
          %2128 = vmatpush2.bf16.msra.mxu0 0
          %2129 = vmatprep.mubr.bf16.mxu0 0
          %2130 = vmatmul.mubr.bf16.gmra.mxu0 %v2091
          %v2131 = vpop.f32.mrf.mxu0
          %v2132 = vadd.f32 0.0, %v2131
          %v2133 = vpop.f32.mrf.mxu0
          %v2134 = vpop.f32.mrf.mxu0
          %v2135 = vadd.f32 0.0, %v2134
          %v2136 = vpop.f32.mrf.mxu0
          %2137 = vdwg.mxu0
          %v2138 = vadd.f32 %v2087, %v2132
          %v2139 = vadd.f32 %v2088, %v2135
        $region101: #{tpu_custom_call.1} parent=59 // loop_footer
          %s1993 = sadd.s32 1, %s1989
        $region102: #{tpu_custom_call.1} parent=59 // loop_footer_branch
          %1988 = sbr.rel target = $region98
        $region103: #{tpu_custom_call.1} parent=59 // loop_exit
          _
        %v2140 = vrcp.pop %v1996
        %v2141 = vrcp.pop %v1997
        %v2142 = vmul.f32 %v1998, %v2140
        %v2143 = vmul.f32 %v1999, %v2141
        %v2144 = vpack.c.bf16 %v2143, %v2142
        %v2146 = vunpack.c.l.b16 %v2144
        %v2147 = vunpack.c.h.b16 %v2144
        %v2148 = vpack.c.b16 %v2146, %v2146
        %v2149 = vpack.c.b16 %v2147, %v2147
        %2152 = vst [vmem:[%s624] sm:$0xf] %v2148
        %2153 = vst [vmem:[%s624 + $0x8] sm:$0xf] %v2149
        %v2154 = vmul.f32 %v1944, %v704
        %v2155 = vmul.f32 %v1948, %v705
        %v2156 = vmul.f32 %v1944, %v1403
        %v2157 = vmul.f32 %v1948, %v1405
        %2160 = vrot.lane.b32.xlu0 %v2156, 96
        %v2161 = vpop.permute.xlu0 %2160
        %2162 = vrot.lane.b32.xlu0 %v2157, 96
        %v2163 = vpop.permute.xlu0 %2162
        %v2166 = vsub.f32 %v2154, %v2161
        %v2167 = vsub.f32 %v2155, %v2163
        %v2168 = vmul.f32 %v1944, %v1423
        %v2169 = vmul.f32 %v1948, %v1425
        %v2170 = vmul.f32 %v1944, %v706
        %v2171 = vmul.f32 %v1948, %v707
        %2174 = vrot.lane.b32.xlu0 %v2170, 32
        %v2175 = vpop.permute.xlu0 %2174
        %2176 = vrot.lane.b32.xlu0 %v2171, 32
        %v2177 = vpop.permute.xlu0 %2176
        %v2180 = vadd.f32 %v2168, %v2175
        %v2181 = vadd.f32 %v2169, %v2177
        %v2182 = vsel %vm1442, %v2166, %v2180
        %v2183 = vsel %vm1442, %v2167, %v2181
        %v2184 = vsel %vm1445, %v2182, %v1944
        %v2185 = vsel %vm1445, %v2183, %v1948
        %v2186 = vpack.c.bf16 %v2185, %v2184
        loop: start=0, step=1, limit=2
        $region104: #{tpu_custom_call.1} parent=59 // loop_pre_header
          _
        $region105: #{tpu_custom_call.1} parent=59 // loop_header
          %s2188 = sphi 0, %s2192
          %p2189 = scmp.ge.s32.totalorder %s2188, 2
          %v2193 = vphi -1e+30, %v2262
          %v2194 = vphi -1e+30, %v2263
          %v2195 = vphi 0.0, %v2284
          %v2196 = vphi 0.0, %v2285
          %v2197 = vphi 0.0, %v2337
          %v2198 = vphi 0.0, %v2338
        $region106: #{tpu_custom_call.1} parent=59 // loop_header_branch
          %2191 = sbr.rel (%p2189) target = $region110
        $region107: #{tpu_custom_call.1} parent=59 // loop_body
          %s2199 = smul.u32 %s2188, 8
          %s2200 = sshra.s32 %s2199, 3
          %s2201 = sand.u32 %s2199, 7
          %s2202 = smul.addr %s2200, 4
          %s2203 = scalar_lea.vmem [#allocation2], %s2202
          %v2204 = vld [vmem:[%s2203] sm:$0xf]
          %s2205 = smul.addr %s2200, 4
          %s2206 = scalar_lea.vmem [#allocation3], %s2205
          %v2207 = vld [vmem:[%s2206] sm:$0xf]
          %2208 = vmatprep.subr.bf16.mxu0 0
          %2209 = vmatpush1.bf16.xpose.msra.mxu0 0
          %2210 = vmatprep.subr.bf16.mxu0 0
          %2211 = vmatpush1.bf16.xpose.msra.mxu0 0
          %2212 = vmatprep.subr.bf16.mxu0 0
          %2213 = vmatpush1.bf16.xpose.msra.mxu0 0
          %2214 = vmatprep.subr.bf16.mxu0 0
          %2215 = vmatpush1.bf16.xpose.msra.mxu0 0
          %2216 = vmatprep.subr.bf16.mxu0 0
          %2217 = vmatpush1.bf16.xpose.msra.mxu0 0
          %2218 = vmatprep.subr.bf16.mxu0 0
          %2219 = vmatpush1.bf16.xpose.msra.mxu0 0
          %2220 = vmatprep.subr.bf16.mxu0 0
          %2221 = vmatpush1.bf16.xpose.msra.mxu0 0
          %2222 = vmatprep.subr.bf16.mxu0 0
          %2223 = vmatpush1.bf16.xpose.msra.mxu0 %v2204
          %2224 = vmatprep.subr.bf16.mxu0 0
          %2225 = vmatpush2.bf16.xpose.msra.mxu0 0
          %2226 = vmatprep.subr.bf16.mxu0 0
          %2227 = vmatpush2.bf16.xpose.msra.mxu0 0
          %2228 = vmatprep.subr.bf16.mxu0 0
          %2229 = vmatpush2.bf16.xpose.msra.mxu0 0
          %2230 = vmatprep.subr.bf16.mxu0 0
          %2231 = vmatpush2.bf16.xpose.msra.mxu0 0
          %2232 = vmatprep.subr.bf16.mxu0 0
          %2233 = vmatpush2.bf16.xpose.msra.mxu0 0
          %2234 = vmatprep.subr.bf16.mxu0 0
          %2235 = vmatpush2.bf16.xpose.msra.mxu0 0
          %2236 = vmatprep.subr.bf16.mxu0 0
          %2237 = vmatpush2.bf16.xpose.msra.mxu0 0
          %2238 = vmatprep.subr.bf16.mxu0 0
          %2239 = vmatpush2.bf16.xpose.msra.mxu0 0
          %2240 = vmatprep.mubr.bf16.mxu0 0
          %2241 = vmatmul.mubr.bf16.gmra.mxu0 %v2186
          %v2242 = vpop.f32.mrf.mxu0
          %v2243 = vadd.f32 0.0, %v2242
          %v2244 = vpop.f32.mrf.mxu0
          %v2245 = vpop.f32.mrf.mxu0
          %v2246 = vadd.f32 0.0, %v2245
          %v2247 = vpop.f32.mrf.mxu0
          %2248 = vdwg.mxu0
          %v2249 = vstv %s2199
          %v2250 = vadd.s32 %v2249, %v1954
          %vm2251 = vcmp.le.s32.totalorder %v2250, %v1951
          %vm2252 = vcmp.le.s32.totalorder %v2250, %v1952
          %v2253 = vsel %vm2251, %v2243, -1e+30
          %v2254 = vsel %vm2252, %v2246, -1e+30
          %vm2255 = vcmask 64512
          %v2256 = vsel %vm2255, %v2253, -inf
          %2257 = vmax.xlane.f32.xlu0 %v2256
          %v2258 = vpop.xlane.xlu0 %2257
          %v2259 = vsel %vm2255, %v2254, -inf
          %2260 = vmax.xlane.f32.xlu0 %v2259
          %v2261 = vpop.xlane.xlu0 %2260
          %v2262 = vmax.f32 %v2193, %v2258
          %v2263 = vmax.f32 %v2194, %v2261
          %v2264 = vsub.f32 %v2193, %v2262
          %v2265 = vsub.f32 %v2194, %v2263
          %v2266 = vmul.f32 %v2264, 1.442695
          %v2267 = vpow.pop %v2266
          %v2268 = vmul.f32 %v2265, 1.442695
          %v2269 = vpow.pop %v2268
          %v2270 = vsub.f32 %v2253, %v2262
          %v2271 = vsub.f32 %v2254, %v2263
          %v2272 = vmul.f32 %v2270, 1.442695
          %v2273 = vpow.pop %v2272
          %v2274 = vmul.f32 %v2271, 1.442695
          %v2275 = vpow.pop %v2274
          %v2276 = vmul.f32 %v2267, %v2195
          %v2277 = vmul.f32 %v2269, %v2196
          %v2278 = vsel %vm2255, %v2273, 0.0
          %2279 = vadd.xlane.f32.xlu0 %v2278
          %v2280 = vpop.xlane.xlu0 %2279
          %v2281 = vsel %vm2255, %v2275, 0.0
          %2282 = vadd.xlane.f32.xlu0 %v2281
          %v2283 = vpop.xlane.xlu0 %2282
          %v2284 = vadd.f32 %v2276, %v2280
          %v2285 = vadd.f32 %v2277, %v2283
          %v2286 = vmul.f32 %v2267, %v2197
          %v2287 = vmul.f32 %v2269, %v2198
          %v2288 = vpack.c.bf16 %v2275, %v2273
          %v2290 = vsel %vm2255, %v2288, 0
          %vm2292 = vcmask 1043456
          %v2294 = vsel %vm2292, %v2207, 0
          %2296 = vmatprep.subr.bf16.mxu0 0
          %2297 = vmatpush1.bf16.msra.mxu0 0
          %2298 = vmatprep.subr.bf16.mxu0 0
          %2299 = vmatpush1.bf16.msra.mxu0 0
          %2300 = vmatprep.subr.bf16.mxu0 0
          %2301 = vmatpush1.bf16.msra.mxu0 0
          %2302 = vmatprep.subr.bf16.mxu0 0
          %2303 = vmatpush1.bf16.msra.mxu0 0
          %2304 = vmatprep.subr.bf16.mxu0 0
          %2305 = vmatpush1.bf16.msra.mxu0 0
          %2306 = vmatprep.subr.bf16.mxu0 0
          %2307 = vmatpush1.bf16.msra.mxu0 0
          %2308 = vmatprep.subr.bf16.mxu0 0
          %2309 = vmatpush1.bf16.msra.mxu0 0
          %2310 = vmatprep.subr.bf16.mxu0 0
          %2311 = vmatpush1.bf16.msra.mxu0 %v2294
          %2312 = vmatprep.subr.bf16.mxu0 0
          %2313 = vmatpush2.bf16.msra.mxu0 0
          %2314 = vmatprep.subr.bf16.mxu0 0
          %2315 = vmatpush2.bf16.msra.mxu0 0
          %2316 = vmatprep.subr.bf16.mxu0 0
          %2317 = vmatpush2.bf16.msra.mxu0 0
          %2318 = vmatprep.subr.bf16.mxu0 0
          %2319 = vmatpush2.bf16.msra.mxu0 0
          %2320 = vmatprep.subr.bf16.mxu0 0
          %2321 = vmatpush2.bf16.msra.mxu0 0
          %2322 = vmatprep.subr.bf16.mxu0 0
          %2323 = vmatpush2.bf16.msra.mxu0 0
          %2324 = vmatprep.subr.bf16.mxu0 0
          %2325 = vmatpush2.bf16.msra.mxu0 0
          %2326 = vmatprep.subr.bf16.mxu0 0
          %2327 = vmatpush2.bf16.msra.mxu0 0
          %2328 = vmatprep.mubr.bf16.mxu0 0
          %2329 = vmatmul.mubr.bf16.gmra.mxu0 %v2290
          %v2330 = vpop.f32.mrf.mxu0
          %v2331 = vadd.f32 0.0, %v2330
          %v2332 = vpop.f32.mrf.mxu0
          %v2333 = vpop.f32.mrf.mxu0
          %v2334 = vadd.f32 0.0, %v2333
          %v2335 = vpop.f32.mrf.mxu0
          %2336 = vdwg.mxu0
          %v2337 = vadd.f32 %v2286, %v2331
          %v2338 = vadd.f32 %v2287, %v2334
        $region108: #{tpu_custom_call.1} parent=59 // loop_footer
          %s2192 = sadd.s32 1, %s2188
        $region109: #{tpu_custom_call.1} parent=59 // loop_footer_branch
          %2187 = sbr.rel target = $region105
        $region110: #{tpu_custom_call.1} parent=59 // loop_exit
          _
        %v2339 = vrcp.pop %v2195
        %v2340 = vrcp.pop %v2196
        %v2341 = vmul.f32 %v2197, %v2339
        %v2342 = vmul.f32 %v2198, %v2340
        %v2343 = vpack.c.bf16 %v2342, %v2341
        %v2345 = vunpack.c.l.b16 %v2343
        %v2346 = vunpack.c.h.b16 %v2343
        %v2347 = vpack.c.b16 %v2345, %v2345
        %v2348 = vpack.c.b16 %v2346, %v2346
        %2351 = vst [vmem:[%s624 + $0x4] sm:$0xf] %v2347
        %2352 = vst [vmem:[%s624 + $0xc] sm:$0xf] %v2348
        %s2353 = sand.u32 %s295, 1
        %s2354 = scalar_lea.sflag [#allocation6], %s2353
        %s2355 = sand.u32 %s295, 1
        %s2356 = smul.addr %s2355, 16
        %s2357 = scalar_lea.vmem [#allocation16], %s2356
        // Predicated region
        $region111: #{tpu_custom_call.1} parent=59 // pred_check
          %p2358 = pneg %p305
        $region112: #{tpu_custom_call.1} parent=59 // pred_check_branch
          %2360 = sbr.rel (%p2358) target = $region114
        $region113: #{tpu_custom_call.1} parent=59 // pred_region
          %s2361 = smul.u32 2, %s32
          %s2363 = ssub.s32 256, 256
          %2364 = vsyncadd %s2354, %s2363
          %s2365 = smul.addr %s33, 8
          %s2366 = sadd.s32 %s2361, %s2365
          %s2367 = smul.addr %s2366, 64
          %s2368 = scalar_lea.hbm %s10, %s2367
          %s2369 = sshll.u32 %s2357, 4
          %s2370 = int_to_ptr.vmem [resolvable:$true] %s2369
          %2375 = dma.vmem_to_hbm [thread:$0]  %s2370, 256, %s2368, %s2354, 128, 256, 8
        $region114: #{tpu_custom_call.1} parent=59 // pred_fallthru
          _
      $region60: #{tpu_custom_call.1} parent=5 // pred_fallthru
        _
      %p2376 = scmp.le.s32.totalorder 2, %s23
      // Predicated region
      $region115: #{tpu_custom_call.1} parent=5 // pred_check
        %p2377 = pneg %p2376
      $region116: #{tpu_custom_call.1} parent=5 // pred_check_branch
        %2379 = sbr.rel (%p2377) target = $region118
      $region117: #{tpu_custom_call.1} parent=5 // pred_region
        %s2380 = ssub.s32 %s23, 2
        // Predicated region
        $region119: #{tpu_custom_call.1} parent=117 // pred_check
          %p2381 = pneg %p311
        $region120: #{tpu_custom_call.1} parent=117 // pred_check_branch
          %2383 = sbr.rel (%p2381) target = $region122
        $region121: #{tpu_custom_call.1} parent=117 // pred_region
          %s2384 = sand.u32 %s296, 1
          %s2385 = scalar_lea.sflag [#allocation6], %s2384
          %s2386 = sand.u32 %s296, 1
          %s2387 = smul.addr %s2386, 16
          %s2388 = scalar_lea.vmem [#allocation16], %s2387
          %2389 = dma.done %s2385, 256
        $region122: #{tpu_custom_call.1} parent=117 // pred_fallthru
          _
      $region118: #{tpu_custom_call.1} parent=5 // pred_fallthru
        _
    $region6: #{tpu_custom_call.1} parent=1 // loop_footer
      %s27 = sadd.s32 1, %s23
    $region7: #{tpu_custom_call.1} parent=1 // loop_footer_branch
      %22 = sbr.rel target = $region3
    $region8: #{tpu_custom_call.1} parent=1 // loop_exit
      _
    %2390 = vsyncpa [#allocation5], 1
    %s2391 = scalar_lea.sflag [#allocation5], 1
    %2392 = vsyncpa %s2391, 1
    %2393 = vsyncpa [#allocation8], 1
    %2394 = vsyncpa [#allocation6], 1
    %s2395 = scalar_lea.sflag [#allocation6], 1
    %2396 = vsyncpa %s2395, 1

</llo_original>
